<compile_context>
chip_gen: v6e
topology: v6e:2x2x1
jax: 0.10.0
libtpu: 0.0.40
codegen_flags: <defaults>
</compile_context>

<pallas_src>
import functools

import jax
import jax.numpy as jnp
from jax import lax
from jax.experimental import pallas as pl
from jax.experimental.pallas import tpu as pltpu

NEG_INF = float("-inf")


def _attention_kernel(xq_ref, xkv_ref, wq_ref, wkv_ref, wo_ref, bo_ref,
                      o_ref,
                      q_scr, m_scr, l_scr, acc_scr,
                      *, heads, dim_head, hidden, f_valid, block_kv, masked,
                      exp_dtype):
    kv_i = pl.program_id(2)

    # ---- init + Q projection (once per (batch, q-tile)) --------------------
    @pl.when(kv_i == 0)
    def _init():
        xq = xq_ref[0]                                              # (dim, bq) bf16
        # softmax scale is already folded into wq (wrapper weight transform)
        q = jnp.dot(wq_ref[...], xq,
                    preferred_element_type=jnp.float32)             # (hidden, bq) f32
        q_scr[...] = q.reshape(heads, dim_head, -1).astype(jnp.bfloat16)
        m_scr[...] = jnp.full(m_scr.shape, NEG_INF, jnp.float32)
        l_scr[...] = jnp.zeros(l_scr.shape, jnp.float32)
        acc_scr[...] = jnp.zeros(acc_scr.shape, jnp.float32)

    # ---- fused K/V projection for the current kv tile (one matmul) ---------
    xkv = xkv_ref[0]                                                # (dim, bkv) bf16
    kv = jnp.dot(wkv_ref[...], xkv,
                 preferred_element_type=jnp.float32)                # (2*hidden, bkv)
    bkv = xkv.shape[-1]
    k = kv[:hidden].reshape(heads, dim_head, bkv).astype(jnp.bfloat16)   # (h, d, bkv)
    v = kv[hidden:].reshape(heads, dim_head, bkv).astype(jnp.bfloat16)   # (h, d, bkv)

    # ---- scores, lane-dense on the q axis: sim[h, j, i] = sum_d k*q --------
    qh = q_scr[...]                                                 # (h, d, bq) bf16
    sim = lax.dot_general(k, qh, (((1,), (1,)), ((0,), (0,))),
                          preferred_element_type=jnp.float32)       # (h, bkv, bq)

    if masked:  # static: only emitted when F was padded; no-op except last kv tile
        limit = f_valid - kv_i * block_kv                           # scalar
        col = lax.broadcasted_iota(jnp.int32, (1, bkv, 1), 1)
        sim = jnp.where(col < limit, sim, NEG_INF)

    # ---- online softmax update (stats lane-dense: (h, 1, bq)) --------------
    m_prev = m_scr[...]                                             # (h, 1, bq)
    m_new = jnp.maximum(m_prev, jnp.max(sim, axis=1, keepdims=True))
    alpha = jnp.exp(m_prev - m_new)                                 # (h, 1, bq) f32
    p = jnp.exp((sim - m_new).astype(exp_dtype))                    # (h, bkv, bq)
    l_scr[...] = alpha * l_scr[...] + jnp.sum(p.astype(jnp.float32),
                                              axis=1, keepdims=True)
    pv = lax.dot_general(v, p.astype(jnp.bfloat16),
                         (((2,), (1,)), ((0,), (0,))),
                         preferred_element_type=jnp.float32)        # (h, d, bq)
    acc_scr[...] = alpha * acc_scr[...] + pv
    m_scr[...] = m_new

    # ---- finalize: normalize + single fused output projection --------------
    @pl.when(kv_i == pl.num_programs(2) - 1)
    def _finalize():
        inv_l = pl.reciprocal(l_scr[...], approx=True)              # (h, 1, bq)
        out = (acc_scr[...] * inv_l).reshape(hidden, -1)            # (hidden, bq) f32
        out = out.astype(jnp.bfloat16)
        y = jnp.dot(wo_ref[...], out,
                    preferred_element_type=jnp.float32)             # (dim, bq)
        o_ref[0] = (y + bo_ref[...]).astype(o_ref.dtype)


def _round_up(x, m):
    return ((x + m - 1) // m) * m


def _tpu_generation():
    try:
        kind = jax.devices()[0].device_kind.lower()
    except Exception:
        return 6
    for g in (7, 6, 5, 4, 3, 2):
        if f"v{g}" in kind:
            return g
    return 6


def _pick_tiles(f, batch, gen):
    """Per-generation tiles & VMEM budget.

    v7x: 64 MiB VMEM/TC, 2 TensorCores -> smaller tiles + megacore balance.
    v5e/v6e: 128 MiB physical VMEM -> bigger kv tile, raised vmem limit.
    F is padded only to a multiple of 128 (lane-dense); tiles divide the
    padded length so awkward sequence lengths don't do ~2x extra work.
    """
    if gen >= 7:
        bq_t, bkv_t, vmem_limit = 256, 512, 48 * 1024 * 1024
    else:
        bq_t, bkv_t, vmem_limit = 512, 1024, 96 * 1024 * 1024

    f_pad = _round_up(f, 128)

    def fit(target):
        if f_pad <= target:
            return f_pad
        for cand in (target, target // 2, target // 4, 256, 128):
            if cand >= 128 and cand % 128 == 0 and f_pad % cand == 0:
                return cand
        return 128

    block_q, block_kv = fit(bq_t), fit(bkv_t)

    # v7x has 2 TensorCores: make sure the "parallel" axes can shard onto both.
    if gen >= 7 and batch * (f_pad // block_q) < 2:
        for cand in (block_q // 2, 256, 128):
            if (cand >= 128 and cand % 128 == 0 and f_pad % cand == 0
                    and batch * (f_pad // cand) >= 2):
                block_q = cand
                break

    return block_q, block_kv, f_pad, vmem_limit


def attention_forward(x, w_qkv, w_out, b_out, *, heads, dim_head):
    B, dim, F = x.shape
    hidden = heads * dim_head
    assert w_qkv.shape == (3 * hidden, dim)
    assert w_out.shape == (dim, hidden)
    assert b_out.shape == (dim, 1)
    scale = dim_head ** (-0.5)

    gen = _tpu_generation()
    # bf16 exponent on v6e/v7x (bf16 EUP path); keep f32 exponent on older parts.
    exp_dtype = jnp.bfloat16 if gen >= 6 else jnp.float32

    # One-time weight transforms (would live at parameter-load time in a model):
    # fold softmax scale into Q rows, fuse K/V weights, cast weights to bf16.
    w_q = (w_qkv[:hidden] * scale).astype(jnp.bfloat16)             # (hidden, dim)
    w_kv = w_qkv[hidden:].astype(jnp.bfloat16)                      # (2*hidden, dim)
    w_o = w_out.astype(jnp.bfloat16)                                # (dim, hidden)
    b_o = b_out.astype(jnp.float32)                                 # (dim, 1)

    block_q, block_kv, F_pad, vmem_limit = _pick_tiles(F, B, gen)
    masked = F_pad != F

    x_bf = x.astype(jnp.bfloat16)                                   # halves HBM traffic
    if masked:
        x_bf = jnp.pad(x_bf, ((0, 0), (0, 0), (0, F_pad - F)))

    num_q = F_pad // block_q
    num_kv = F_pad // block_kv

    kernel = functools.partial(
        _attention_kernel, heads=heads, dim_head=dim_head, hidden=hidden,
        f_valid=F, block_kv=block_kv, masked=masked, exp_dtype=exp_dtype)

    out = pl.pallas_call(
        kernel,
        out_shape=jax.ShapeDtypeStruct((B, dim, F_pad), x.dtype),
        grid=(B, num_q, num_kv),
        in_specs=[
            pl.BlockSpec((1, dim, block_q), lambda b, qi, ki: (b, 0, qi)),   # x (q tile)
            pl.BlockSpec((1, dim, block_kv), lambda b, qi, ki: (b, 0, ki)),  # x (kv tile)
            pl.BlockSpec((hidden, dim), lambda b, qi, ki: (0, 0)),           # w_q
            pl.BlockSpec((2 * hidden, dim), lambda b, qi, ki: (0, 0)),       # w_kv (fused)
            pl.BlockSpec((dim, hidden), lambda b, qi, ki: (0, 0)),           # w_out
            pl.BlockSpec((dim, 1), lambda b, qi, ki: (0, 0)),                # b_out
        ],
        out_specs=pl.BlockSpec((1, dim, block_q), lambda b, qi, ki: (b, 0, qi)),
        scratch_shapes=[
            pltpu.VMEM((heads, dim_head, block_q), jnp.bfloat16),   # q tile
            pltpu.VMEM((heads, 1, block_q), jnp.float32),           # running max m
            pltpu.VMEM((heads, 1, block_q), jnp.float32),           # running sum l
            pltpu.VMEM((heads, dim_head, block_q), jnp.float32),    # output accumulator
        ],
        compiler_params=pltpu.CompilerParams(
            dimension_semantics=("parallel", "parallel", "arbitrary"),
            vmem_limit_bytes=vmem_limit),
    )(x_bf, x_bf, w_q, w_kv, w_o, b_o)

    return out[:, :, :F] if masked else out


def attention_reference(x, w_qkv, w_out, b_out, *, heads, dim_head):
    """Pure-JAX f32 reference matching the PyTorch forward semantics."""
    B, dim, F = x.shape
    hidden = heads * dim_head
    scale = dim_head ** (-0.5)
    qkv = jnp.einsum('oc,bcf->bof', w_qkv, x)                       # (B, 3*hidden, F)
    q, k, v = jnp.split(qkv, 3, axis=1)
    resh = lambda t: t.reshape(B, heads, dim_head, F)
    q, k, v = resh(q) * scale, resh(k), resh(v)
    sim = jnp.einsum('bhdi,bhdj->bhij', q, k)
    sim = sim - jnp.max(sim, axis=-1, keepdims=True)
    attn = jax.nn.softmax(sim, axis=-1)
    out = jnp.einsum('bhij,bhdj->bhid', attn, v)                    # (B, H, F, d)
    out = jnp.transpose(out, (0, 1, 3, 2)).reshape(B, hidden, F)
    return jnp.einsum('oc,bcf->bof', w_out, out) + b_out[None, :, :]


if __name__ == "__main__":
    B, dim, F = 2, 8, 16
    heads, dim_head = 4, 32
    hidden = heads * dim_head

    key = jax.random.PRNGKey(0)
    kx, kqkv, kw, kb = jax.random.split(key, 4)

    x = jax.random.normal(kx, (B, dim, F), dtype=jnp.float32)
    # Deterministic synthetic parameters (same shapes as the PyTorch module).
    w_qkv = jax.random.normal(kqkv, (3 * hidden, dim), dtype=jnp.float32) * 0.05
    w_out = jax.random.normal(kw, (dim, hidden), dtype=jnp.float32) * 0.05
    b_out = jax.random.normal(kb, (dim, 1), dtype=jnp.float32) * 0.05

    y = attention_forward(x, w_qkv, w_out, b_out, heads=heads, dim_head=dim_head)
    y = jax.block_until_ready(y)

    y_ref = attention_reference(x, w_qkv, w_out, b_out,
                                heads=heads, dim_head=dim_head)
    assert y.shape == (B, dim, F)
    # bf16 MXU inputs / bf16 exp with f32 accumulation -> loosened tolerance.
    assert jnp.allclose(y, y_ref, atol=2e-2, rtol=2e-2), "mismatch vs reference"

    print("KERNEL_OK")
</pallas_src>

<mosaic_0001>
module attributes {stable_mosaic.version = 11 : i64} {
  func.func @_attention_kernel(%arg0: i32, %arg1: i32, %arg2: i32, %arg3: memref<1x8x128xbf16, #tpu.memory_space<vmem>>, %arg4: memref<1x8x128xbf16, #tpu.memory_space<vmem>>, %arg5: memref<128x8xbf16, #tpu.memory_space<vmem>>, %arg6: memref<256x8xbf16, #tpu.memory_space<vmem>>, %arg7: memref<8x128xbf16, #tpu.memory_space<vmem>>, %arg8: memref<8x1xf32, #tpu.memory_space<vmem>>, %arg9: memref<1x8x128xf32, #tpu.memory_space<vmem>>, %arg10: memref<4x32x128xbf16, #tpu.memory_space<vmem>>, %arg11: memref<4x1x128xf32, #tpu.memory_space<vmem>>, %arg12: memref<4x1x128xf32, #tpu.memory_space<vmem>>, %arg13: memref<4x32x128xf32, #tpu.memory_space<vmem>>) attributes {dimension_semantics = [#tpu.dimension_semantics<parallel>, #tpu.dimension_semantics<parallel>, #tpu.dimension_semantics<arbitrary>], iteration_bounds = array<i64: 2, 1, 1>, scalar_prefetch = 0 : i64, scratch_operands = 4 : i64, tpu.core_type = #tpu.core_type<tc>, window_params = [{transform_indices = @transform_0, window_bounds = array<i64: 1, 8, 128>}, {transform_indices = @transform_1, window_bounds = array<i64: 1, 8, 128>}, {pipeline_mode = #tpu.pipeline_mode<synchronous>, transform_indices = @transform_2, window_bounds = array<i64: 128, 8>}, {pipeline_mode = #tpu.pipeline_mode<synchronous>, transform_indices = @transform_3, window_bounds = array<i64: 256, 8>}, {pipeline_mode = #tpu.pipeline_mode<synchronous>, transform_indices = @transform_4, window_bounds = array<i64: 8, 128>}, {pipeline_mode = #tpu.pipeline_mode<synchronous>, transform_indices = @transform_5, window_bounds = array<i64: 8, 1>}, {transform_indices = @transform_6, window_bounds = array<i64: 1, 8, 128>}]} {
    %c0_i32 = arith.constant 0 : i32
    %0 = arith.cmpi eq, %arg2, %c0_i32 : i32
    %1 = arith.extui %0 : i1 to i32
    %c0_i32_0 = arith.constant 0 : i32
    %2 = arith.cmpi ne, %1, %c0_i32_0 : i32
    scf.if %2 {
      %c0_33 = arith.constant 0 : index
      %c0_34 = arith.constant 0 : index
      %c0_35 = arith.constant 0 : index
      %51 = vector.load %arg3[%c0_33, %c0_34, %c0_35] : memref<1x8x128xbf16, #tpu.memory_space<vmem>>, vector<1x8x128xbf16>
      %52 = vector.shape_cast %51 : vector<1x8x128xbf16> to vector<8x128xbf16>
      %c0_36 = arith.constant 0 : index
      %c0_37 = arith.constant 0 : index
      %53 = vector.load %arg5[%c0_36, %c0_37] : memref<128x8xbf16, #tpu.memory_space<vmem>>, vector<128x8xbf16>
      %cst_38 = arith.constant dense<0.000000e+00> : vector<128x128xf32>
      %54 = tpu.matmul %53, %52, %cst_38 {dimension_numbers = #tpu.dot_dimension_numbers<[1], [0], [0], [1], [0, 0, 1, 1], [], []>} : vector<128x8xbf16>, vector<8x128xbf16>, vector<128x128xf32> -> vector<128x128xf32>
      %55 = vector.shape_cast %54 : vector<128x128xf32> to vector<4x32x128xf32>
      %56 = arith.truncf %55 : vector<4x32x128xf32> to vector<4x32x128xbf16>
      %c0_39 = arith.constant 0 : index
      %c0_40 = arith.constant 0 : index
      %c0_41 = arith.constant 0 : index
      %57 = vector.load %arg10[%c0_39, %c0_40, %c0_41] : memref<4x32x128xbf16, #tpu.memory_space<vmem>>, vector<4x32x128xbf16>
      tpu.vector_store %arg10[%c0_39, %c0_40, %c0_41], %56 {strides = array<i32>} : memref<4x32x128xbf16, #tpu.memory_space<vmem>>, vector<4x32x128xbf16>,
      %cst_42 = arith.constant 0xFF800000 : f32
      %58 = vector.broadcast %cst_42 : f32 to vector<4x1x128xf32>
      %c0_43 = arith.constant 0 : index
      %c0_44 = arith.constant 0 : index
      %c0_45 = arith.constant 0 : index
      %59 = vector.load %arg11[%c0_43, %c0_44, %c0_45] : memref<4x1x128xf32, #tpu.memory_space<vmem>>, vector<4x1x128xf32>
      tpu.vector_store %arg11[%c0_43, %c0_44, %c0_45], %58 {strides = array<i32>} : memref<4x1x128xf32, #tpu.memory_space<vmem>>, vector<4x1x128xf32>,
      %cst_46 = arith.constant 0.000000e+00 : f32
      %60 = vector.broadcast %cst_46 : f32 to vector<4x1x128xf32>
      %c0_47 = arith.constant 0 : index
      %c0_48 = arith.constant 0 : index
      %c0_49 = arith.constant 0 : index
      %61 = vector.load %arg12[%c0_47, %c0_48, %c0_49] : memref<4x1x128xf32, #tpu.memory_space<vmem>>, vector<4x1x128xf32>
      tpu.vector_store %arg12[%c0_47, %c0_48, %c0_49], %60 {strides = array<i32>} : memref<4x1x128xf32, #tpu.memory_space<vmem>>, vector<4x1x128xf32>,
      %cst_50 = arith.constant 0.000000e+00 : f32
      %62 = vector.broadcast %cst_50 : f32 to vector<4x32x128xf32>
      %c0_51 = arith.constant 0 : index
      %c0_52 = arith.constant 0 : index
      %c0_53 = arith.constant 0 : index
      %63 = vector.load %arg13[%c0_51, %c0_52, %c0_53] : memref<4x32x128xf32, #tpu.memory_space<vmem>>, vector<4x32x128xf32>
      tpu.vector_store %arg13[%c0_51, %c0_52, %c0_53], %62 {strides = array<i32>} : memref<4x32x128xf32, #tpu.memory_space<vmem>>, vector<4x32x128xf32>,
    } else {
    }
    %c0 = arith.constant 0 : index
    %c0_1 = arith.constant 0 : index
    %c0_2 = arith.constant 0 : index
    %3 = vector.load %arg4[%c0, %c0_1, %c0_2] : memref<1x8x128xbf16, #tpu.memory_space<vmem>>, vector<1x8x128xbf16>
    %4 = vector.shape_cast %3 : vector<1x8x128xbf16> to vector<8x128xbf16>
    %c0_3 = arith.constant 0 : index
    %c0_4 = arith.constant 0 : index
    %5 = vector.load %arg6[%c0_3, %c0_4] : memref<256x8xbf16, #tpu.memory_space<vmem>>, vector<256x8xbf16>
    %cst = arith.constant dense<0.000000e+00> : vector<256x128xf32>
    %6 = tpu.matmul %5, %4, %cst {dimension_numbers = #tpu.dot_dimension_numbers<[1], [0], [0], [1], [0, 0, 1, 1], [], []>} : vector<256x8xbf16>, vector<8x128xbf16>, vector<256x128xf32> -> vector<256x128xf32>
    %7 = vector.extract_strided_slice %6 {offsets = [0, 0], sizes = [128, 128], strides = [1, 1]} : vector<256x128xf32> to vector<128x128xf32>
    %8 = vector.shape_cast %7 : vector<128x128xf32> to vector<4x32x128xf32>
    %9 = arith.truncf %8 : vector<4x32x128xf32> to vector<4x32x128xbf16>
    %10 = vector.extract_strided_slice %6 {offsets = [128, 0], sizes = [128, 128], strides = [1, 1]} : vector<256x128xf32> to vector<128x128xf32>
    %11 = vector.shape_cast %10 : vector<128x128xf32> to vector<4x32x128xf32>
    %12 = arith.truncf %11 : vector<4x32x128xf32> to vector<4x32x128xbf16>
    %c0_5 = arith.constant 0 : index
    %c0_6 = arith.constant 0 : index
    %c0_7 = arith.constant 0 : index
    %13 = vector.load %arg10[%c0_5, %c0_6, %c0_7] : memref<4x32x128xbf16, #tpu.memory_space<vmem>>, vector<4x32x128xbf16>
    %cst_8 = arith.constant dense<0.000000e+00> : vector<4x128x128xf32>
    %14 = tpu.matmul %9, %13, %cst_8 {dimension_numbers = #tpu.dot_dimension_numbers<[1], [1], [2], [2], [0, 0, 0, 2, 1, 2], [0], [0]>} : vector<4x32x128xbf16>, vector<4x32x128xbf16>, vector<4x128x128xf32> -> vector<4x128x128xf32>
    %c128_i32 = arith.constant 128 : i32
    %15 = arith.muli %arg2, %c128_i32 : i32
    %c16_i32 = arith.constant 16 : i32
    %16 = arith.subi %c16_i32, %15 : i32
    %17 = tpu.iota {dimensions = array<i32: 1>} : vector<1x128x1xi32>
    %18 = vector.broadcast %16 : i32 to vector<1x128x1xi32>
    %19 = arith.cmpi slt, %17, %18 : vector<1x128x1xi32>
    %cst_9 = arith.constant 0xFF800000 : f32
    %20 = vector.shape_cast %19 : vector<1x128x1xi1> to vector<1x128x1xi1>
    %21 = vector.broadcast %20 : vector<1x128x1xi1> to vector<4x128x128xi1>
    %22 = vector.broadcast %cst_9 : f32 to vector<4x128x128xf32>
    %23 = arith.select %21, %14, %22 : vector<4x128x128xi1>, vector<4x128x128xf32>
    %c0_10 = arith.constant 0 : index
    %c0_11 = arith.constant 0 : index
    %c0_12 = arith.constant 0 : index
    %24 = vector.load %arg11[%c0_10, %c0_11, %c0_12] : memref<4x1x128xf32, #tpu.memory_space<vmem>>, vector<4x1x128xf32>
    %cst_13 = arith.constant dense<0xFF800000> : vector<4x128xf32>
    %25 = vector.multi_reduction <maximumf>, %23, %cst_13 [1] : vector<4x128x128xf32> to vector<4x128xf32>
    %26 = vector.shape_cast %25 : vector<4x128xf32> to vector<4x1x128xf32>
    %27 = arith.maximumf %24, %26 : vector<4x1x128xf32>
    %28 = arith.subf %24, %27 : vector<4x1x128xf32>
    %29 = math.exp %28 : vector<4x1x128xf32>
    %30 = vector.broadcast %27 : vector<4x1x128xf32> to vector<4x128x128xf32>
    %31 = arith.subf %23, %30 : vector<4x128x128xf32>
    %32 = arith.truncf %31 : vector<4x128x128xf32> to vector<4x128x128xbf16>
    %33 = math.exp %32 : vector<4x128x128xbf16>
    %c0_14 = arith.constant 0 : index
    %c0_15 = arith.constant 0 : index
    %c0_16 = arith.constant 0 : index
    %34 = vector.load %arg12[%c0_14, %c0_15, %c0_16] : memref<4x1x128xf32, #tpu.memory_space<vmem>>, vector<4x1x128xf32>
    %35 = arith.mulf %29, %34 : vector<4x1x128xf32>
    %36 = arith.extf %33 : vector<4x128x128xbf16> to vector<4x128x128xf32>
    %cst_17 = arith.constant dense<0.000000e+00> : vector<4x128xf32>
    %37 = vector.multi_reduction <add>, %36, %cst_17 [1] : vector<4x128x128xf32> to vector<4x128xf32>
    %38 = vector.shape_cast %37 : vector<4x128xf32> to vector<4x1x128xf32>
    %39 = arith.addf %35, %38 : vector<4x1x128xf32>
    %c0_18 = arith.constant 0 : index
    %c0_19 = arith.constant 0 : index
    %c0_20 = arith.constant 0 : index
    %40 = vector.load %arg12[%c0_18, %c0_19, %c0_20] : memref<4x1x128xf32, #tpu.memory_space<vmem>>, vector<4x1x128xf32>
    tpu.vector_store %arg12[%c0_18, %c0_19, %c0_20], %39 {strides = array<i32>} : memref<4x1x128xf32, #tpu.memory_space<vmem>>, vector<4x1x128xf32>,
    %cst_21 = arith.constant dense<0.000000e+00> : vector<4x32x128xf32>
    %41 = tpu.matmul %12, %33, %cst_21 {dimension_numbers = #tpu.dot_dimension_numbers<[2], [1], [1], [2], [0, 0, 0, 1, 1, 2], [0], [0]>} : vector<4x32x128xbf16>, vector<4x128x128xbf16>, vector<4x32x128xf32> -> vector<4x32x128xf32>
    %c0_22 = arith.constant 0 : index
    %c0_23 = arith.constant 0 : index
    %c0_24 = arith.constant 0 : index
    %42 = vector.load %arg13[%c0_22, %c0_23, %c0_24] : memref<4x32x128xf32, #tpu.memory_space<vmem>>, vector<4x32x128xf32>
    %43 = vector.broadcast %29 : vector<4x1x128xf32> to vector<4x32x128xf32>
    %44 = arith.mulf %43, %42 : vector<4x32x128xf32>
    %45 = arith.addf %44, %41 : vector<4x32x128xf32>
    %c0_25 = arith.constant 0 : index
    %c0_26 = arith.constant 0 : index
    %c0_27 = arith.constant 0 : index
    %46 = vector.load %arg13[%c0_25, %c0_26, %c0_27] : memref<4x32x128xf32, #tpu.memory_space<vmem>>, vector<4x32x128xf32>
    tpu.vector_store %arg13[%c0_25, %c0_26, %c0_27], %45 {strides = array<i32>} : memref<4x32x128xf32, #tpu.memory_space<vmem>>, vector<4x32x128xf32>,
    %c0_28 = arith.constant 0 : index
    %c0_29 = arith.constant 0 : index
    %c0_30 = arith.constant 0 : index
    %47 = vector.load %arg11[%c0_28, %c0_29, %c0_30] : memref<4x1x128xf32, #tpu.memory_space<vmem>>, vector<4x1x128xf32>
    tpu.vector_store %arg11[%c0_28, %c0_29, %c0_30], %27 {strides = array<i32>} : memref<4x1x128xf32, #tpu.memory_space<vmem>>, vector<4x1x128xf32>,
    %c0_i32_31 = arith.constant 0 : i32
    %48 = arith.cmpi eq, %arg2, %c0_i32_31 : i32
    %49 = arith.extui %48 : i1 to i32
    %c0_i32_32 = arith.constant 0 : i32
    %50 = arith.cmpi ne, %49, %c0_i32_32 : i32
    scf.if %50 {
      %c0_33 = arith.constant 0 : index
      %c0_34 = arith.constant 0 : index
      %c0_35 = arith.constant 0 : index
      %51 = vector.load %arg12[%c0_33, %c0_34, %c0_35] : memref<4x1x128xf32, #tpu.memory_space<vmem>>, vector<4x1x128xf32>
      %52 = tpu.reciprocal %51 {approx = true} : vector<4x1x128xf32> -> vector<4x1x128xf32>
      %c0_36 = arith.constant 0 : index
      %c0_37 = arith.constant 0 : index
      %c0_38 = arith.constant 0 : index
      %53 = vector.load %arg13[%c0_36, %c0_37, %c0_38] : memref<4x32x128xf32, #tpu.memory_space<vmem>>, vector<4x32x128xf32>
      %54 = vector.broadcast %52 : vector<4x1x128xf32> to vector<4x32x128xf32>
      %55 = arith.mulf %53, %54 : vector<4x32x128xf32>
      %56 = vector.shape_cast %55 : vector<4x32x128xf32> to vector<128x128xf32>
      %57 = arith.truncf %56 : vector<128x128xf32> to vector<128x128xbf16>
      %c0_39 = arith.constant 0 : index
      %c0_40 = arith.constant 0 : index
      %58 = vector.load %arg7[%c0_39, %c0_40] : memref<8x128xbf16, #tpu.memory_space<vmem>>, vector<8x128xbf16>
      %cst_41 = arith.constant dense<0.000000e+00> : vector<8x128xf32>
      %59 = tpu.matmul %58, %57, %cst_41 {dimension_numbers = #tpu.dot_dimension_numbers<[1], [0], [0], [1], [0, 0, 1, 1], [], []>} : vector<8x128xbf16>, vector<128x128xbf16>, vector<8x128xf32> -> vector<8x128xf32>
      %c0_42 = arith.constant 0 : index
      %c0_43 = arith.constant 0 : index
      %60 = vector.load %arg8[%c0_42, %c0_43] : memref<8x1xf32, #tpu.memory_space<vmem>>, vector<8x1xf32>
      %61 = vector.broadcast %60 : vector<8x1xf32> to vector<8x128xf32>
      %62 = arith.addf %59, %61 : vector<8x128xf32>
      %c0_44 = arith.constant 0 : index
      %c0_45 = arith.constant 0 : index
      %c0_46 = arith.constant 0 : index
      %63 = vector.load %arg9[%c0_44, %c0_45, %c0_46] : memref<1x8x128xf32, #tpu.memory_space<vmem>>, vector<1x8x128xf32>
      %64 = vector.shape_cast %63 : vector<1x8x128xf32> to vector<8x128xf32>
      %65 = vector.shape_cast %62 : vector<8x128xf32> to vector<1x8x128xf32>
      tpu.vector_store %arg9[%c0_44, %c0_45, %c0_46], %65 {strides = array<i32>} : memref<1x8x128xf32, #tpu.memory_space<vmem>>, vector<1x8x128xf32>,
    } else {
    }
    return
  }
  func.func @transform_0(%arg0: i32, %arg1: i32, %arg2: i32) -> (i32, i32, i32) {
    %c0_i32 = arith.constant 0 : i32
    %c0_i32_0 = arith.constant 0 : i32
    return %arg0, %c0_i32, %arg1 : i32, i32, i32
  }
  func.func @transform_1(%arg0: i32, %arg1: i32, %arg2: i32) -> (i32, i32, i32) {
    %c0_i32 = arith.constant 0 : i32
    %c0_i32_0 = arith.constant 0 : i32
    return %arg0, %c0_i32, %arg2 : i32, i32, i32
  }
  func.func @transform_2(%arg0: i32, %arg1: i32, %arg2: i32) -> (i32, i32) {
    %c0_i32 = arith.constant 0 : i32
    %c0_i32_0 = arith.constant 0 : i32
    %c0_i32_1 = arith.constant 0 : i32
    return %c0_i32, %c0_i32_0 : i32, i32
  }
  func.func @transform_3(%arg0: i32, %arg1: i32, %arg2: i32) -> (i32, i32) {
    %c0_i32 = arith.constant 0 : i32
    %c0_i32_0 = arith.constant 0 : i32
    %c0_i32_1 = arith.constant 0 : i32
    return %c0_i32, %c0_i32_0 : i32, i32
  }
  func.func @transform_4(%arg0: i32, %arg1: i32, %arg2: i32) -> (i32, i32) {
    %c0_i32 = arith.constant 0 : i32
    %c0_i32_0 = arith.constant 0 : i32
    %c0_i32_1 = arith.constant 0 : i32
    return %c0_i32, %c0_i32_0 : i32, i32
  }
  func.func @transform_5(%arg0: i32, %arg1: i32, %arg2: i32) -> (i32, i32) {
    %c0_i32 = arith.constant 0 : i32
    %c0_i32_0 = arith.constant 0 : i32
    %c0_i32_1 = arith.constant 0 : i32
    return %c0_i32, %c0_i32_0 : i32, i32
  }
  func.func @transform_6(%arg0: i32, %arg1: i32, %arg2: i32) -> (i32, i32, i32) {
    %c0_i32 = arith.constant 0 : i32
    %c0_i32_0 = arith.constant 0 : i32
    return %arg0, %c0_i32, %arg1 : i32, i32, i32
  }
}

</mosaic_0001>

<llo_original>
// kernel: tpu_custom_call.1
$region0: #{tpu_custom_call.1}
  #allocation0 [shape = 'u32[]', space=smem, size = 0x4, offset = 0x4, fixed_abs, tag = 'smem constant byte address 0x4 - core index']
  #allocation1 [shape = 'u32[144,128]{1,0:T(1,128)}', space=vmem, size = 0x12000, scoped, tag = 'internal scratch']
  #allocation2 [shape = 'bf16[4,32,128]{2,1,0:T(8,128)(2,1)}', space=vmem, size = 0x8000, scoped, tag = 'scratch operand']
  #allocation3 [shape = 'f32[4,1,128]{2,1,0:T(1,128)}', space=vmem, size = 0x800, scoped, tag = 'scratch operand']
  #allocation4 [shape = 'f32[4,1,128]{2,1,0:T(1,128)}', space=vmem, size = 0x800, scoped, tag = 'scratch operand']
  #allocation5 [shape = 'f32[4,32,128]{2,1,0:T(8,128)}', space=vmem, size = 0x10000, scoped, tag = 'scratch operand']
  %s0 = inlined_call_operand.vmem [shape: bf16[2,8,128], index: 0, kind: input, shape index: {}]
  %s1 = inlined_call_operand.vmem [shape: bf16[2,8,128], index: 1, kind: input, shape index: {}]
  %s2 = inlined_call_operand.vmem [shape: bf16[128,8], index: 2, kind: input, shape index: {}]
  %s3 = inlined_call_operand.vmem [shape: bf16[256,8], index: 3, kind: input, shape index: {}]
  %s4 = inlined_call_operand.vmem [shape: bf16[8,128], index: 4, kind: input, shape index: {}]
  %s5 = inlined_call_operand.vmem [shape: f32[8,1], index: 5, kind: input, shape index: {}]
  %s6 = inlined_call_operand.hbm [shape: f32[2,8,128], index: 6, kind: output, shape index: {}]
  %s7 = sld [smem:[#allocation0]]
  $region65: #{tpu_custom_call.1} parent=0
    _
  %s9 = ssub.s32 1, %s7
  %s10 = scalar_select 0, %s9, %s7
  $region1: #{tpu_custom_call.1} parent=0
    #allocation6 [shape = 'u8[8192]{0}', space=vmem, size = 0x2000, scoped, tag = 'output window, operand 0']
    #allocation7 [shape = 's32[2]{0}', space=sflag, size = 0x8, scoped, tag = 'scoped memory for tpu_custom_call.1']
    %11 = vsyncpa [#allocation7], 0
    %s12 = scalar_lea.sflag [#allocation7], 1
    %13 = vsyncpa %s12, 0
    loop: start=0, step=1, limit=4
    $region2: #{tpu_custom_call.1} parent=1 // loop_pre_header
      _
    $region3: #{tpu_custom_call.1} parent=1 // loop_header
      %s15 = sphi 0, %s19
      %p16 = scmp.ge.s32.totalorder %s15, 4
      %s22 = sphi 0, %s41
      %s23 = sphi 0, %s37
      %s24 = sphi 0, %s33
      %s25 = sphi 0, %s22
      %s26 = sphi 0, %s23
      %s27 = sphi 0, %s24
      %s28 = sphi 0, %s25
      %s29 = sphi 0, %s26
      %s30 = sphi 0, %s27
      %s46 = sphi 0, %s48
      %s49 = sphi 0, %s46
      %s50 = sphi 0, %s49
      %s66 = sphi 0, %s50
      %s74 = sphi 0, %s76
      %s77 = sphi 0, %s74
      %s78 = sphi 0, %s77
      %s94 = sphi 0, %s78
      %s98 = sphi 0, %s98
      %s100 = sphi 0, %s98
      %s101 = sphi 0, %s100
      %s115 = sphi 0, %s101
      %s119 = sphi 0, %s119
      %s121 = sphi 0, %s119
      %s122 = sphi 0, %s121
      %s136 = sphi 0, %s122
      %s140 = sphi 0, %s140
      %s142 = sphi 0, %s140
      %s143 = sphi 0, %s142
      %s157 = sphi 0, %s143
      %s161 = sphi 0, %s161
      %s163 = sphi 0, %s161
      %s164 = sphi 0, %s163
      %s178 = sphi 0, %s164
      %s186 = sphi 0, %s188
      %s189 = sphi 0, %s186
      %s190 = sphi 0, %s189
      %s206 = sphi 0, %s190
    $region4: #{tpu_custom_call.1} parent=1 // loop_header_branch
      %18 = sbr.rel (%p16) target = $region8
    $region5: #{tpu_custom_call.1} parent=1 // loop_body
      %s20 = ssub.s32 %s15, 1
      %s21 = ssub.s32 %s15, 2
      %s31 = sadd.s32 1, %s24
      %p32 = scmp.ge.s32.totalorder %s31, 1
      %s33 = scalar_select %p32, 0, %s31
      %s34 = sadd.s32 1, %s23
      %s35 = scalar_select %p32, %s34, %s23
      %p36 = scmp.ge.s32.totalorder %s35, 1
      %s37 = scalar_select %p36, 0, %s35
      %s38 = sadd.s32 1, %s22
      %s39 = scalar_select %p36, %s38, %s22
      %p40 = scmp.ge.s32.totalorder %s39, 2
      %s41 = scalar_select %p40, 0, %s39
      %s42 = ssub.s32 %s22, %s41
      %s43 = ssub.s32 %s23, %s37
      %s44 = sor.u32 %s42, %s43
      %p45 = scmp.eq.s32.totalorder %s44, 0
      %s47 = sadd.s32 %s46, 1
      %s48 = scalar_select %p45, %s46, %s47
      %p51 = pneg %p45
      %p52 = scmp.eq.s32.totalorder %s15, 1
      %p53 = por %p51, %p52
      %p54 = scmp.ne.s32.totalorder %s46, %s49
      %p55 = scmp.eq.s32.totalorder %s15, 0
      %p56 = por %p54, %p55
      %p57 = scmp.ne.s32.totalorder %s46, %s49
      %p58 = scmp.eq.s32.totalorder %s20, 1
      %p59 = por %p57, %p58
      %p60 = scmp.ne.s32.totalorder %s49, %s50
      %p61 = scmp.eq.s32.totalorder %s20, 0
      %p62 = por %p60, %p61
      %p63 = scmp.ne.s32.totalorder %s49, %s50
      %p64 = scmp.eq.s32.totalorder %s21, 1
      %p65 = por %p63, %p64
      %p67 = scmp.ne.s32.totalorder %s50, %s66
      %p68 = scmp.eq.s32.totalorder %s21, 0
      %p69 = por %p67, %p68
      %s70 = ssub.s32 %s22, %s41
      %s71 = ssub.s32 %s24, %s33
      %s72 = sor.u32 %s70, %s71
      %p73 = scmp.eq.s32.totalorder %s72, 0
      %s75 = sadd.s32 %s74, 1
      %s76 = scalar_select %p73, %s74, %s75
      %p79 = pneg %p73
      %p80 = scmp.eq.s32.totalorder %s15, 1
      %p81 = por %p79, %p80
      %p82 = scmp.ne.s32.totalorder %s74, %s77
      %p83 = scmp.eq.s32.totalorder %s15, 0
      %p84 = por %p82, %p83
      %p85 = scmp.ne.s32.totalorder %s74, %s77
      %p86 = scmp.eq.s32.totalorder %s20, 1
      %p87 = por %p85, %p86
      %p88 = scmp.ne.s32.totalorder %s77, %s78
      %p89 = scmp.eq.s32.totalorder %s20, 0
      %p90 = por %p88, %p89
      %p91 = scmp.ne.s32.totalorder %s77, %s78
      %p92 = scmp.eq.s32.totalorder %s21, 1
      %p93 = por %p91, %p92
      %p95 = scmp.ne.s32.totalorder %s78, %s94
      %p96 = scmp.eq.s32.totalorder %s21, 0
      %p97 = por %p95, %p96
      %s99 = sadd.s32 %s98, 1
      %p102 = scmp.eq.s32.totalorder %s15, 1
      %p103 = scmp.ne.s32.totalorder %s98, %s100
      %p104 = scmp.eq.s32.totalorder %s15, 0
      %p105 = por %p103, %p104
      %p106 = scmp.ne.s32.totalorder %s98, %s100
      %p107 = scmp.eq.s32.totalorder %s20, 1
      %p108 = por %p106, %p107
      %p109 = scmp.ne.s32.totalorder %s100, %s101
      %p110 = scmp.eq.s32.totalorder %s20, 0
      %p111 = por %p109, %p110
      %p112 = scmp.ne.s32.totalorder %s100, %s101
      %p113 = scmp.eq.s32.totalorder %s21, 1
      %p114 = por %p112, %p113
      %p116 = scmp.ne.s32.totalorder %s101, %s115
      %p117 = scmp.eq.s32.totalorder %s21, 0
      %p118 = por %p116, %p117
      %s120 = sadd.s32 %s119, 1
      %p123 = scmp.eq.s32.totalorder %s15, 1
      %p124 = scmp.ne.s32.totalorder %s119, %s121
      %p125 = scmp.eq.s32.totalorder %s15, 0
      %p126 = por %p124, %p125
      %p127 = scmp.ne.s32.totalorder %s119, %s121
      %p128 = scmp.eq.s32.totalorder %s20, 1
      %p129 = por %p127, %p128
      %p130 = scmp.ne.s32.totalorder %s121, %s122
      %p131 = scmp.eq.s32.totalorder %s20, 0
      %p132 = por %p130, %p131
      %p133 = scmp.ne.s32.totalorder %s121, %s122
      %p134 = scmp.eq.s32.totalorder %s21, 1
      %p135 = por %p133, %p134
      %p137 = scmp.ne.s32.totalorder %s122, %s136
      %p138 = scmp.eq.s32.totalorder %s21, 0
      %p139 = por %p137, %p138
      %s141 = sadd.s32 %s140, 1
      %p144 = scmp.eq.s32.totalorder %s15, 1
      %p145 = scmp.ne.s32.totalorder %s140, %s142
      %p146 = scmp.eq.s32.totalorder %s15, 0
      %p147 = por %p145, %p146
      %p148 = scmp.ne.s32.totalorder %s140, %s142
      %p149 = scmp.eq.s32.totalorder %s20, 1
      %p150 = por %p148, %p149
      %p151 = scmp.ne.s32.totalorder %s142, %s143
      %p152 = scmp.eq.s32.totalorder %s20, 0
      %p153 = por %p151, %p152
      %p154 = scmp.ne.s32.totalorder %s142, %s143
      %p155 = scmp.eq.s32.totalorder %s21, 1
      %p156 = por %p154, %p155
      %p158 = scmp.ne.s32.totalorder %s143, %s157
      %p159 = scmp.eq.s32.totalorder %s21, 0
      %p160 = por %p158, %p159
      %s162 = sadd.s32 %s161, 1
      %p165 = scmp.eq.s32.totalorder %s15, 1
      %p166 = scmp.ne.s32.totalorder %s161, %s163
      %p167 = scmp.eq.s32.totalorder %s15, 0
      %p168 = por %p166, %p167
      %p169 = scmp.ne.s32.totalorder %s161, %s163
      %p170 = scmp.eq.s32.totalorder %s20, 1
      %p171 = por %p169, %p170
      %p172 = scmp.ne.s32.totalorder %s163, %s164
      %p173 = scmp.eq.s32.totalorder %s20, 0
      %p174 = por %p172, %p173
      %p175 = scmp.ne.s32.totalorder %s163, %s164
      %p176 = scmp.eq.s32.totalorder %s21, 1
      %p177 = por %p175, %p176
      %p179 = scmp.ne.s32.totalorder %s164, %s178
      %p180 = scmp.eq.s32.totalorder %s21, 0
      %p181 = por %p179, %p180
      %s182 = ssub.s32 %s22, %s41
      %s183 = ssub.s32 %s23, %s37
      %s184 = sor.u32 %s182, %s183
      %p185 = scmp.eq.s32.totalorder %s184, 0
      %s187 = sadd.s32 %s186, 1
      %s188 = scalar_select %p185, %s186, %s187
      %p191 = pneg %p185
      %p192 = scmp.eq.s32.totalorder %s15, 1
      %p193 = por %p191, %p192
      %p194 = scmp.ne.s32.totalorder %s186, %s189
      %p195 = scmp.eq.s32.totalorder %s15, 0
      %p196 = por %p194, %p195
      %p197 = scmp.ne.s32.totalorder %s186, %s189
      %p198 = scmp.eq.s32.totalorder %s20, 1
      %p199 = por %p197, %p198
      %p200 = scmp.ne.s32.totalorder %s189, %s190
      %p201 = scmp.eq.s32.totalorder %s20, 0
      %p202 = por %p200, %p201
      %p203 = scmp.ne.s32.totalorder %s189, %s190
      %p204 = scmp.eq.s32.totalorder %s21, 1
      %p205 = por %p203, %p204
      %p207 = scmp.ne.s32.totalorder %s190, %s206
      %p208 = scmp.eq.s32.totalorder %s21, 0
      %p209 = por %p207, %p208
      %p210 = scmp.le.s32.totalorder 1, %s15
      %p211 = scmp.lt.s32.totalorder %s15, 3
      %p212 = pnand %p210, %p211
      %p213 = pneg %p212
      // Predicated region
      $region9: #{tpu_custom_call.1} parent=5 // pred_check
        _
      $region10: #{tpu_custom_call.1} parent=5 // pred_check_branch
        %215 = sbr.rel (%p212) target = $region12
      $region11: #{tpu_custom_call.1} parent=5 // pred_region
        %s216 = ssub.s32 %s15, 1
        // Predicated region
        $region13: #{tpu_custom_call.1} parent=11 // pred_check
          %p217 = pneg %p111
        $region14: #{tpu_custom_call.1} parent=11 // pred_check_branch
          %219 = sbr.rel (%p217) target = $region16
        $region15: #{tpu_custom_call.1} parent=11 // pred_region
          _
        $region16: #{tpu_custom_call.1} parent=11 // pred_fallthru
          _
        // Predicated region
        $region17: #{tpu_custom_call.1} parent=11 // pred_check
          %p220 = pneg %p132
        $region18: #{tpu_custom_call.1} parent=11 // pred_check_branch
          %222 = sbr.rel (%p220) target = $region20
        $region19: #{tpu_custom_call.1} parent=11 // pred_region
          _
        $region20: #{tpu_custom_call.1} parent=11 // pred_fallthru
          _
        // Predicated region
        $region21: #{tpu_custom_call.1} parent=11 // pred_check
          %p223 = pneg %p153
        $region22: #{tpu_custom_call.1} parent=11 // pred_check_branch
          %225 = sbr.rel (%p223) target = $region24
        $region23: #{tpu_custom_call.1} parent=11 // pred_region
          _
        $region24: #{tpu_custom_call.1} parent=11 // pred_fallthru
          _
        // Predicated region
        $region25: #{tpu_custom_call.1} parent=11 // pred_check
          %p226 = pneg %p174
        $region26: #{tpu_custom_call.1} parent=11 // pred_check_branch
          %228 = sbr.rel (%p226) target = $region28
        $region27: #{tpu_custom_call.1} parent=11 // pred_region
          _
        $region28: #{tpu_custom_call.1} parent=11 // pred_fallthru
          _
      $region12: #{tpu_custom_call.1} parent=5 // pred_fallthru
        _
      %p229 = scmp.lt.s32.totalorder %s15, 2
      // Predicated region
      $region29: #{tpu_custom_call.1} parent=5 // pred_check
        %p230 = pneg %p229
      $region30: #{tpu_custom_call.1} parent=5 // pred_check_branch
        %232 = sbr.rel (%p230) target = $region32
      $region31: #{tpu_custom_call.1} parent=5 // pred_region
        // Predicated region
        $region33: #{tpu_custom_call.1} parent=31 // pred_check
          %p233 = pneg %p56
        $region34: #{tpu_custom_call.1} parent=31 // pred_check_branch
          %235 = sbr.rel (%p233) target = $region36
        $region35: #{tpu_custom_call.1} parent=31 // pred_region
          %p236 = scmp.lt.s32.totalorder %s22, 1
          %s237 = scalar_select %p236, %s22, 1
          %p238 = scmp.lt.s32.totalorder %s23, 0
          %s239 = scalar_select %p238, %s23, 0
          %s240 = sadd.s32 %s239, %s237
          %s241 = smul.addr %s240, 4
          %s242 = scalar_lea.vmem %s0, %s241
        $region36: #{tpu_custom_call.1} parent=31 // pred_fallthru
          _
        // Predicated region
        $region37: #{tpu_custom_call.1} parent=31 // pred_check
          %p243 = pneg %p84
        $region38: #{tpu_custom_call.1} parent=31 // pred_check_branch
          %245 = sbr.rel (%p243) target = $region40
        $region39: #{tpu_custom_call.1} parent=31 // pred_region
          %p246 = scmp.lt.s32.totalorder %s22, 1
          %s247 = scalar_select %p246, %s22, 1
          %p248 = scmp.lt.s32.totalorder %s24, 0
          %s249 = scalar_select %p248, %s24, 0
          %s250 = sadd.s32 %s249, %s247
          %s251 = smul.addr %s250, 4
          %s252 = scalar_lea.vmem %s1, %s251
        $region40: #{tpu_custom_call.1} parent=31 // pred_fallthru
          _
      $region32: #{tpu_custom_call.1} parent=5 // pred_fallthru
        _
      %p253 = scmp.le.s32.totalorder 1, %s15
      %p254 = scmp.lt.s32.totalorder %s15, 3
      %p255 = pnand %p253, %p254
      %p256 = pneg %p255
      // Predicated region
      $region41: #{tpu_custom_call.1} parent=5 // pred_check
        _
      $region42: #{tpu_custom_call.1} parent=5 // pred_check_branch
        %258 = sbr.rel (%p255) target = $region44
      $region43: #{tpu_custom_call.1} parent=5 // pred_region
        %s259 = ssub.s32 %s15, 1
        %p260 = scmp.lt.s32.totalorder %s25, 1
        %s261 = scalar_select %p260, %s25, 1
        %p262 = scmp.lt.s32.totalorder %s26, 0
        %s263 = scalar_select %p262, %s26, 0
        %s264 = sadd.s32 %s263, %s261
        %s265 = smul.addr %s264, 4
        %s266 = scalar_lea.vmem %s0, %s265
        %p267 = pneg %p62
        %p268 = pneg %p59
        %p269 = scmp.lt.s32.totalorder %s25, 1
        %s270 = scalar_select %p269, %s25, 1
        %p271 = scmp.lt.s32.totalorder %s27, 0
        %s272 = scalar_select %p271, %s27, 0
        %s273 = sadd.s32 %s272, %s270
        %s274 = smul.addr %s273, 4
        %s275 = scalar_lea.vmem %s1, %s274
        %p276 = pneg %p90
        %p277 = pneg %p87
        %p278 = pneg %p111
        %p279 = pneg %p108
        %p280 = pneg %p132
        %p281 = pneg %p129
        %p282 = pneg %p153
        %p283 = pneg %p150
        %p284 = pneg %p174
        %p285 = pneg %p171
        %p286 = pneg %p202
        %p287 = pneg %p199
        %s288 = sand.u32 %s189, 1
        %s289 = scalar_lea.sflag [#allocation7], %s288
        %s290 = sand.u32 %s189, 1
        %s291 = smul.addr %s290, 8
        %s292 = scalar_lea.vmem [#allocation6], %s291
        %p293 = scmp.lt.s32.totalorder %s25, 1
        %s294 = scalar_select %p293, %s25, 1
        %p295 = scmp.lt.s32.totalorder %s26, 0
        %s296 = scalar_select %p295, %s26, 0
        %s297 = sadd.s32 %s296, %s294
        %s298 = smul.addr %s297, 4
        %s299 = scalar_lea.vmem %s0, %s298
        %p300 = scmp.lt.s32.totalorder %s25, 1
        %s301 = scalar_select %p300, %s25, 1
        %p302 = scmp.lt.s32.totalorder %s27, 0
        %s303 = scalar_select %p302, %s27, 0
        %s304 = sadd.s32 %s303, %s301
        %s305 = smul.addr %s304, 4
        %s306 = scalar_lea.vmem %s1, %s305
        %p308 = scmp.eq.s32.totalorder %s27, 0
        // Predicated region
        $region45: #{tpu_custom_call.1} parent=43 // pred_check
          %p309 = pneg %p308
        $region46: #{tpu_custom_call.1} parent=43 // pred_check_branch
          %311 = sbr.rel (%p309) target = $region48
        $region47: #{tpu_custom_call.1} parent=43 // pred_region
          %v312 = vld [vmem:[%s299] sm:$0xf]
          %v313 = vld [vmem:[%s2] sm:$0xf]
          %v314 = vld [vmem:[%s2 + $0x4] sm:$0xf]
          %v315 = vld [vmem:[%s2 + $0x8] sm:$0xf]
          %v316 = vld [vmem:[%s2 + $0xc] sm:$0xf]
          %v317 = vld [vmem:[%s2 + $0x10] sm:$0xf]
          %v318 = vld [vmem:[%s2 + $0x14] sm:$0xf]
          %v319 = vld [vmem:[%s2 + $0x18] sm:$0xf]
          %v320 = vld [vmem:[%s2 + $0x1c] sm:$0xf]
          %v321 = vld [vmem:[%s2 + $0x20] sm:$0xf]
          %v322 = vld [vmem:[%s2 + $0x24] sm:$0xf]
          %v323 = vld [vmem:[%s2 + $0x28] sm:$0xf]
          %v324 = vld [vmem:[%s2 + $0x2c] sm:$0xf]
          %v325 = vld [vmem:[%s2 + $0x30] sm:$0xf]
          %v326 = vld [vmem:[%s2 + $0x34] sm:$0xf]
          %v327 = vld [vmem:[%s2 + $0x38] sm:$0xf]
          %v328 = vld [vmem:[%s2 + $0x3c] sm:$0xf]
          %v345 = vunpack.c.l.b16 %v313
          %v346 = vunpack.c.l.b16 %v314
          %v347 = vunpack.c.l.b16 %v315
          %v348 = vunpack.c.l.b16 %v316
          %v349 = vunpack.c.l.b16 %v317
          %v350 = vunpack.c.l.b16 %v318
          %v351 = vunpack.c.l.b16 %v319
          %v352 = vunpack.c.l.b16 %v320
          %v353 = vunpack.c.l.b16 %v321
          %v354 = vunpack.c.l.b16 %v322
          %v355 = vunpack.c.l.b16 %v323
          %v356 = vunpack.c.l.b16 %v324
          %v357 = vunpack.c.l.b16 %v325
          %v358 = vunpack.c.l.b16 %v326
          %v359 = vunpack.c.l.b16 %v327
          %v360 = vunpack.c.l.b16 %v328
          %v361 = vpack.c.b16 %v346, %v345
          %v362 = vpack.c.b16 %v348, %v347
          %v363 = vpack.c.b16 %v350, %v349
          %v364 = vpack.c.b16 %v352, %v351
          %v365 = vpack.c.b16 %v354, %v353
          %v366 = vpack.c.b16 %v356, %v355
          %v367 = vpack.c.b16 %v358, %v357
          %v368 = vpack.c.b16 %v360, %v359
          %vm369 = vcmask 64512
          %v371 = vsel %vm369, %v361, 0
          %v374 = vsel %vm369, %v362, 0
          %v377 = vsel %vm369, %v363, 0
          %v380 = vsel %vm369, %v364, 0
          %v383 = vsel %vm369, %v365, 0
          %v386 = vsel %vm369, %v366, 0
          %v389 = vsel %vm369, %v367, 0
          %v392 = vsel %vm369, %v368, 0
          %vm394 = vcmask 1043456
          %v396 = vsel %vm394, %v312, 0
          %398 = vmatprep.subr.bf16.mxu0 0
          %399 = vmatpush1.bf16.msra.mxu0 0
          %400 = vmatprep.subr.bf16.mxu0 0
          %401 = vmatpush1.bf16.msra.mxu0 0
          %402 = vmatprep.subr.bf16.mxu0 0
          %403 = vmatpush1.bf16.msra.mxu0 0
          %404 = vmatprep.subr.bf16.mxu0 0
          %405 = vmatpush1.bf16.msra.mxu0 0
          %406 = vmatprep.subr.bf16.mxu0 0
          %407 = vmatpush1.bf16.msra.mxu0 0
          %408 = vmatprep.subr.bf16.mxu0 0
          %409 = vmatpush1.bf16.msra.mxu0 0
          %410 = vmatprep.subr.bf16.mxu0 0
          %411 = vmatpush1.bf16.msra.mxu0 0
          %412 = vmatprep.subr.bf16.mxu0 0
          %413 = vmatpush1.bf16.msra.mxu0 %v396
          %414 = vmatprep.subr.bf16.mxu0 0
          %415 = vmatpush2.bf16.msra.mxu0 0
          %416 = vmatprep.subr.bf16.mxu0 0
          %417 = vmatpush2.bf16.msra.mxu0 0
          %418 = vmatprep.subr.bf16.mxu0 0
          %419 = vmatpush2.bf16.msra.mxu0 0
          %420 = vmatprep.subr.bf16.mxu0 0
          %421 = vmatpush2.bf16.msra.mxu0 0
          %422 = vmatprep.subr.bf16.mxu0 0
          %423 = vmatpush2.bf16.msra.mxu0 0
          %424 = vmatprep.subr.bf16.mxu0 0
          %425 = vmatpush2.bf16.msra.mxu0 0
          %426 = vmatprep.subr.bf16.mxu0 0
          %427 = vmatpush2.bf16.msra.mxu0 0
          %428 = vmatprep.subr.bf16.mxu0 0
          %429 = vmatpush2.bf16.msra.mxu0 0
          %430 = vmatprep.mubr.bf16.mxu0 0
          %431 = vmatmul.mubr.bf16.gmra.mxu0 %v371
          %v432 = vpop.f32.mrf.mxu0
          %v433 = vadd.f32 0.0, %v432
          %v434 = vpop.f32.mrf.mxu0
          %v435 = vpop.f32.mrf.mxu0
          %v436 = vadd.f32 0.0, %v435
          %v437 = vpop.f32.mrf.mxu0
          %438 = vmatprep.mubr.bf16.mxu0 0
          %439 = vmatmul.mubr.bf16.gmra.mxu0 %v374
          %v440 = vpop.f32.mrf.mxu0
          %v441 = vadd.f32 0.0, %v440
          %v442 = vpop.f32.mrf.mxu0
          %v443 = vpop.f32.mrf.mxu0
          %v444 = vadd.f32 0.0, %v443
          %v445 = vpop.f32.mrf.mxu0
          %446 = vmatprep.mubr.bf16.mxu0 0
          %447 = vmatmul.mubr.bf16.gmra.mxu0 %v377
          %v448 = vpop.f32.mrf.mxu0
          %v449 = vadd.f32 0.0, %v448
          %v450 = vpop.f32.mrf.mxu0
          %v451 = vpop.f32.mrf.mxu0
          %v452 = vadd.f32 0.0, %v451
          %v453 = vpop.f32.mrf.mxu0
          %454 = vmatprep.mubr.bf16.mxu0 0
          %455 = vmatmul.mubr.bf16.gmra.mxu0 %v380
          %v456 = vpop.f32.mrf.mxu0
          %v457 = vadd.f32 0.0, %v456
          %v458 = vpop.f32.mrf.mxu0
          %v459 = vpop.f32.mrf.mxu0
          %v460 = vadd.f32 0.0, %v459
          %v461 = vpop.f32.mrf.mxu0
          %462 = vmatprep.mubr.bf16.mxu0 0
          %463 = vmatmul.mubr.bf16.gmra.mxu0 %v383
          %v464 = vpop.f32.mrf.mxu0
          %v465 = vadd.f32 0.0, %v464
          %v466 = vpop.f32.mrf.mxu0
          %v467 = vpop.f32.mrf.mxu0
          %v468 = vadd.f32 0.0, %v467
          %v469 = vpop.f32.mrf.mxu0
          %470 = vmatprep.mubr.bf16.mxu0 0
          %471 = vmatmul.mubr.bf16.gmra.mxu0 %v386
          %v472 = vpop.f32.mrf.mxu0
          %v473 = vadd.f32 0.0, %v472
          %v474 = vpop.f32.mrf.mxu0
          %v475 = vpop.f32.mrf.mxu0
          %v476 = vadd.f32 0.0, %v475
          %v477 = vpop.f32.mrf.mxu0
          %478 = vmatprep.mubr.bf16.mxu0 0
          %479 = vmatmul.mubr.bf16.gmra.mxu0 %v389
          %v480 = vpop.f32.mrf.mxu0
          %v481 = vadd.f32 0.0, %v480
          %v482 = vpop.f32.mrf.mxu0
          %v483 = vpop.f32.mrf.mxu0
          %v484 = vadd.f32 0.0, %v483
          %v485 = vpop.f32.mrf.mxu0
          %486 = vmatprep.mubr.bf16.mxu0 0
          %487 = vmatmul.mubr.bf16.gmra.mxu0 %v392
          %v488 = vpop.f32.mrf.mxu0
          %v489 = vadd.f32 0.0, %v488
          %v490 = vpop.f32.mrf.mxu0
          %v491 = vpop.f32.mrf.mxu0
          %v492 = vadd.f32 0.0, %v491
          %v493 = vpop.f32.mrf.mxu0
          %494 = vdwg.mxu0
          %v495 = vpack.c.bf16 %v436, %v433
          %v496 = vpack.c.bf16 %v444, %v441
          %v497 = vpack.c.bf16 %v452, %v449
          %v498 = vpack.c.bf16 %v460, %v457
          %v499 = vpack.c.bf16 %v468, %v465
          %v500 = vpack.c.bf16 %v476, %v473
          %v501 = vpack.c.bf16 %v484, %v481
          %v502 = vpack.c.bf16 %v492, %v489
          %v511 = vunpack.c.l.b16 %v495
          %v512 = vunpack.c.h.b16 %v495
          %v513 = vunpack.c.l.b16 %v496
          %v514 = vunpack.c.h.b16 %v496
          %v515 = vunpack.c.l.b16 %v497
          %v516 = vunpack.c.h.b16 %v497
          %v517 = vunpack.c.l.b16 %v498
          %v518 = vunpack.c.h.b16 %v498
          %v519 = vunpack.c.l.b16 %v499
          %v520 = vunpack.c.h.b16 %v499
          %v521 = vunpack.c.l.b16 %v500
          %v522 = vunpack.c.h.b16 %v500
          %v523 = vunpack.c.l.b16 %v501
          %v524 = vunpack.c.h.b16 %v501
          %v525 = vunpack.c.l.b16 %v502
          %v526 = vunpack.c.h.b16 %v502
          %v527 = vpack.c.b16 %v511, %v511
          %v528 = vpack.c.b16 %v512, %v512
          %v529 = vpack.c.b16 %v513, %v513
          %v530 = vpack.c.b16 %v514, %v514
          %v531 = vpack.c.b16 %v515, %v515
          %v532 = vpack.c.b16 %v516, %v516
          %v533 = vpack.c.b16 %v517, %v517
          %v534 = vpack.c.b16 %v518, %v518
          %v535 = vpack.c.b16 %v519, %v519
          %v536 = vpack.c.b16 %v520, %v520
          %v537 = vpack.c.b16 %v521, %v521
          %v538 = vpack.c.b16 %v522, %v522
          %v539 = vpack.c.b16 %v523, %v523
          %v540 = vpack.c.b16 %v524, %v524
          %v541 = vpack.c.b16 %v525, %v525
          %v542 = vpack.c.b16 %v526, %v526
          %559 = vst [vmem:[#allocation2] sm:$0xf] %v527
          %560 = vst [vmem:[#allocation2 + $0x4] sm:$0xf] %v528
          %561 = vst [vmem:[#allocation2 + $0x8] sm:$0xf] %v529
          %562 = vst [vmem:[#allocation2 + $0xc] sm:$0xf] %v530
          %563 = vst [vmem:[#allocation2 + $0x10] sm:$0xf] %v531
          %564 = vst [vmem:[#allocation2 + $0x14] sm:$0xf] %v532
          %565 = vst [vmem:[#allocation2 + $0x18] sm:$0xf] %v533
          %566 = vst [vmem:[#allocation2 + $0x1c] sm:$0xf] %v534
          %567 = vst [vmem:[#allocation2 + $0x20] sm:$0xf] %v535
          %568 = vst [vmem:[#allocation2 + $0x24] sm:$0xf] %v536
          %569 = vst [vmem:[#allocation2 + $0x28] sm:$0xf] %v537
          %570 = vst [vmem:[#allocation2 + $0x2c] sm:$0xf] %v538
          %571 = vst [vmem:[#allocation2 + $0x30] sm:$0xf] %v539
          %572 = vst [vmem:[#allocation2 + $0x34] sm:$0xf] %v540
          %573 = vst [vmem:[#allocation2 + $0x38] sm:$0xf] %v541
          %574 = vst [vmem:[#allocation2 + $0x3c] sm:$0xf] %v542
          %575 = vst [vmem:[#allocation3] sm:$0x1] -inf
          %576 = vst [vmem:[#allocation3 + $0x1] sm:$0x1] -inf
          %577 = vst [vmem:[#allocation3 + $0x2] sm:$0x1] -inf
          %578 = vst [vmem:[#allocation3 + $0x3] sm:$0x1] -inf
          %579 = vst [vmem:[#allocation4] sm:$0x1] 0.0
          %580 = vst [vmem:[#allocation4 + $0x1] sm:$0x1] 0.0
          %581 = vst [vmem:[#allocation4 + $0x2] sm:$0x1] 0.0
          %582 = vst [vmem:[#allocation4 + $0x3] sm:$0x1] 0.0
          %583 = vst [vmem:[#allocation5] sm:$0xff] 0.0
          %584 = vst [vmem:[#allocation5 + $0x8] sm:$0xff] 0.0
          %585 = vst [vmem:[#allocation5 + $0x10] sm:$0xff] 0.0
          %586 = vst [vmem:[#allocation5 + $0x18] sm:$0xff] 0.0
          %587 = vst [vmem:[#allocation5 + $0x20] sm:$0xff] 0.0
          %588 = vst [vmem:[#allocation5 + $0x28] sm:$0xff] 0.0
          %589 = vst [vmem:[#allocation5 + $0x30] sm:$0xff] 0.0
          %590 = vst [vmem:[#allocation5 + $0x38] sm:$0xff] 0.0
          %591 = vst [vmem:[#allocation5 + $0x40] sm:$0xff] 0.0
          %592 = vst [vmem:[#allocation5 + $0x48] sm:$0xff] 0.0
          %593 = vst [vmem:[#allocation5 + $0x50] sm:$0xff] 0.0
          %594 = vst [vmem:[#allocation5 + $0x58] sm:$0xff] 0.0
          %595 = vst [vmem:[#allocation5 + $0x60] sm:$0xff] 0.0
          %596 = vst [vmem:[#allocation5 + $0x68] sm:$0xff] 0.0
          %597 = vst [vmem:[#allocation5 + $0x70] sm:$0xff] 0.0
          %598 = vst [vmem:[#allocation5 + $0x78] sm:$0xff] 0.0
        $region48: #{tpu_custom_call.1} parent=43 // pred_fallthru
          _
        %v599 = vld [vmem:[%s306] sm:$0xf]
        %v600 = vld [vmem:[%s3] sm:$0xf]
        %v601 = vld [vmem:[%s3 + $0x4] sm:$0xf]
        %v602 = vld [vmem:[%s3 + $0x8] sm:$0xf]
        %v603 = vld [vmem:[%s3 + $0xc] sm:$0xf]
        %v604 = vld [vmem:[%s3 + $0x10] sm:$0xf]
        %v605 = vld [vmem:[%s3 + $0x14] sm:$0xf]
        %v606 = vld [vmem:[%s3 + $0x18] sm:$0xf]
        %v607 = vld [vmem:[%s3 + $0x1c] sm:$0xf]
        %v608 = vld [vmem:[%s3 + $0x20] sm:$0xf]
        %v609 = vld [vmem:[%s3 + $0x24] sm:$0xf]
        %v610 = vld [vmem:[%s3 + $0x28] sm:$0xf]
        %v611 = vld [vmem:[%s3 + $0x2c] sm:$0xf]
        %v612 = vld [vmem:[%s3 + $0x30] sm:$0xf]
        %v613 = vld [vmem:[%s3 + $0x34] sm:$0xf]
        %v614 = vld [vmem:[%s3 + $0x38] sm:$0xf]
        %v615 = vld [vmem:[%s3 + $0x3c] sm:$0xf]
        %v616 = vld [vmem:[%s3 + $0x40] sm:$0xf]
        %v617 = vld [vmem:[%s3 + $0x44] sm:$0xf]
        %v618 = vld [vmem:[%s3 + $0x48] sm:$0xf]
        %v619 = vld [vmem:[%s3 + $0x4c] sm:$0xf]
        %v620 = vld [vmem:[%s3 + $0x50] sm:$0xf]
        %v621 = vld [vmem:[%s3 + $0x54] sm:$0xf]
        %v622 = vld [vmem:[%s3 + $0x58] sm:$0xf]
        %v623 = vld [vmem:[%s3 + $0x5c] sm:$0xf]
        %v624 = vld [vmem:[%s3 + $0x60] sm:$0xf]
        %v625 = vld [vmem:[%s3 + $0x64] sm:$0xf]
        %v626 = vld [vmem:[%s3 + $0x68] sm:$0xf]
        %v627 = vld [vmem:[%s3 + $0x6c] sm:$0xf]
        %v628 = vld [vmem:[%s3 + $0x70] sm:$0xf]
        %v629 = vld [vmem:[%s3 + $0x74] sm:$0xf]
        %v630 = vld [vmem:[%s3 + $0x78] sm:$0xf]
        %v631 = vld [vmem:[%s3 + $0x7c] sm:$0xf]
        %v664 = vunpack.c.l.b16 %v600
        %v665 = vunpack.c.l.b16 %v601
        %v666 = vunpack.c.l.b16 %v602
        %v667 = vunpack.c.l.b16 %v603
        %v668 = vunpack.c.l.b16 %v604
        %v669 = vunpack.c.l.b16 %v605
        %v670 = vunpack.c.l.b16 %v606
        %v671 = vunpack.c.l.b16 %v607
        %v672 = vunpack.c.l.b16 %v608
        %v673 = vunpack.c.l.b16 %v609
        %v674 = vunpack.c.l.b16 %v610
        %v675 = vunpack.c.l.b16 %v611
        %v676 = vunpack.c.l.b16 %v612
        %v677 = vunpack.c.l.b16 %v613
        %v678 = vunpack.c.l.b16 %v614
        %v679 = vunpack.c.l.b16 %v615
        %v680 = vunpack.c.l.b16 %v616
        %v681 = vunpack.c.l.b16 %v617
        %v682 = vunpack.c.l.b16 %v618
        %v683 = vunpack.c.l.b16 %v619
        %v684 = vunpack.c.l.b16 %v620
        %v685 = vunpack.c.l.b16 %v621
        %v686 = vunpack.c.l.b16 %v622
        %v687 = vunpack.c.l.b16 %v623
        %v688 = vunpack.c.l.b16 %v624
        %v689 = vunpack.c.l.b16 %v625
        %v690 = vunpack.c.l.b16 %v626
        %v691 = vunpack.c.l.b16 %v627
        %v692 = vunpack.c.l.b16 %v628
        %v693 = vunpack.c.l.b16 %v629
        %v694 = vunpack.c.l.b16 %v630
        %v695 = vunpack.c.l.b16 %v631
        %v696 = vpack.c.b16 %v665, %v664
        %v697 = vpack.c.b16 %v667, %v666
        %v698 = vpack.c.b16 %v669, %v668
        %v699 = vpack.c.b16 %v671, %v670
        %v700 = vpack.c.b16 %v673, %v672
        %v701 = vpack.c.b16 %v675, %v674
        %v702 = vpack.c.b16 %v677, %v676
        %v703 = vpack.c.b16 %v679, %v678
        %v704 = vpack.c.b16 %v681, %v680
        %v705 = vpack.c.b16 %v683, %v682
        %v706 = vpack.c.b16 %v685, %v684
        %v707 = vpack.c.b16 %v687, %v686
        %v708 = vpack.c.b16 %v689, %v688
        %v709 = vpack.c.b16 %v691, %v690
        %v710 = vpack.c.b16 %v693, %v692
        %v711 = vpack.c.b16 %v695, %v694
        %vm712 = vcmask 64512
        %v714 = vsel %vm712, %v696, 0
        %v717 = vsel %vm712, %v697, 0
        %v720 = vsel %vm712, %v698, 0
        %v723 = vsel %vm712, %v699, 0
        %v726 = vsel %vm712, %v700, 0
        %v729 = vsel %vm712, %v701, 0
        %v732 = vsel %vm712, %v702, 0
        %v735 = vsel %vm712, %v703, 0
        %v738 = vsel %vm712, %v704, 0
        %v741 = vsel %vm712, %v705, 0
        %v744 = vsel %vm712, %v706, 0
        %v747 = vsel %vm712, %v707, 0
        %v750 = vsel %vm712, %v708, 0
        %v753 = vsel %vm712, %v709, 0
        %v756 = vsel %vm712, %v710, 0
        %v759 = vsel %vm712, %v711, 0
        %vm761 = vcmask 1043456
        %v763 = vsel %vm761, %v599, 0
        %765 = vmatprep.subr.bf16.mxu0 0
        %766 = vmatpush1.bf16.msra.mxu0 0
        %767 = vmatprep.subr.bf16.mxu0 0
        %768 = vmatpush1.bf16.msra.mxu0 0
        %769 = vmatprep.subr.bf16.mxu0 0
        %770 = vmatpush1.bf16.msra.mxu0 0
        %771 = vmatprep.subr.bf16.mxu0 0
        %772 = vmatpush1.bf16.msra.mxu0 0
        %773 = vmatprep.subr.bf16.mxu0 0
        %774 = vmatpush1.bf16.msra.mxu0 0
        %775 = vmatprep.subr.bf16.mxu0 0
        %776 = vmatpush1.bf16.msra.mxu0 0
        %777 = vmatprep.subr.bf16.mxu0 0
        %778 = vmatpush1.bf16.msra.mxu0 0
        %779 = vmatprep.subr.bf16.mxu0 0
        %780 = vmatpush1.bf16.msra.mxu0 %v763
        %781 = vmatprep.subr.bf16.mxu0 0
        %782 = vmatpush2.bf16.msra.mxu0 0
        %783 = vmatprep.subr.bf16.mxu0 0
        %784 = vmatpush2.bf16.msra.mxu0 0
        %785 = vmatprep.subr.bf16.mxu0 0
        %786 = vmatpush2.bf16.msra.mxu0 0
        %787 = vmatprep.subr.bf16.mxu0 0
        %788 = vmatpush2.bf16.msra.mxu0 0
        %789 = vmatprep.subr.bf16.mxu0 0
        %790 = vmatpush2.bf16.msra.mxu0 0
        %791 = vmatprep.subr.bf16.mxu0 0
        %792 = vmatpush2.bf16.msra.mxu0 0
        %793 = vmatprep.subr.bf16.mxu0 0
        %794 = vmatpush2.bf16.msra.mxu0 0
        %795 = vmatprep.subr.bf16.mxu0 0
        %796 = vmatpush2.bf16.msra.mxu0 0
        %797 = vmatprep.mubr.bf16.mxu0 0
        %798 = vmatmul.mubr.bf16.gmra.mxu0 %v714
        %v799 = vpop.f32.mrf.mxu0
        %v800 = vadd.f32 0.0, %v799
        %v801 = vpop.f32.mrf.mxu0
        %v802 = vpop.f32.mrf.mxu0
        %v803 = vadd.f32 0.0, %v802
        %v804 = vpop.f32.mrf.mxu0
        %805 = vmatprep.mubr.bf16.mxu0 0
        %806 = vmatmul.mubr.bf16.gmra.mxu0 %v717
        %v807 = vpop.f32.mrf.mxu0
        %v808 = vadd.f32 0.0, %v807
        %v809 = vpop.f32.mrf.mxu0
        %v810 = vpop.f32.mrf.mxu0
        %v811 = vadd.f32 0.0, %v810
        %v812 = vpop.f32.mrf.mxu0
        %813 = vmatprep.mubr.bf16.mxu0 0
        %814 = vmatmul.mubr.bf16.gmra.mxu0 %v720
        %v815 = vpop.f32.mrf.mxu0
        %v816 = vadd.f32 0.0, %v815
        %v817 = vpop.f32.mrf.mxu0
        %v818 = vpop.f32.mrf.mxu0
        %v819 = vadd.f32 0.0, %v818
        %v820 = vpop.f32.mrf.mxu0
        %821 = vmatprep.mubr.bf16.mxu0 0
        %822 = vmatmul.mubr.bf16.gmra.mxu0 %v723
        %v823 = vpop.f32.mrf.mxu0
        %v824 = vadd.f32 0.0, %v823
        %v825 = vpop.f32.mrf.mxu0
        %v826 = vpop.f32.mrf.mxu0
        %v827 = vadd.f32 0.0, %v826
        %v828 = vpop.f32.mrf.mxu0
        %829 = vmatprep.mubr.bf16.mxu0 0
        %830 = vmatmul.mubr.bf16.gmra.mxu0 %v726
        %v831 = vpop.f32.mrf.mxu0
        %v832 = vadd.f32 0.0, %v831
        %v833 = vpop.f32.mrf.mxu0
        %v834 = vpop.f32.mrf.mxu0
        %v835 = vadd.f32 0.0, %v834
        %v836 = vpop.f32.mrf.mxu0
        %837 = vmatprep.mubr.bf16.mxu0 0
        %838 = vmatmul.mubr.bf16.gmra.mxu0 %v729
        %v839 = vpop.f32.mrf.mxu0
        %v840 = vadd.f32 0.0, %v839
        %v841 = vpop.f32.mrf.mxu0
        %v842 = vpop.f32.mrf.mxu0
        %v843 = vadd.f32 0.0, %v842
        %v844 = vpop.f32.mrf.mxu0
        %845 = vmatprep.mubr.bf16.mxu0 0
        %846 = vmatmul.mubr.bf16.gmra.mxu0 %v732
        %v847 = vpop.f32.mrf.mxu0
        %v848 = vadd.f32 0.0, %v847
        %v849 = vpop.f32.mrf.mxu0
        %v850 = vpop.f32.mrf.mxu0
        %v851 = vadd.f32 0.0, %v850
        %v852 = vpop.f32.mrf.mxu0
        %853 = vmatprep.mubr.bf16.mxu0 0
        %854 = vmatmul.mubr.bf16.gmra.mxu0 %v735
        %v855 = vpop.f32.mrf.mxu0
        %v856 = vadd.f32 0.0, %v855
        %v857 = vpop.f32.mrf.mxu0
        %v858 = vpop.f32.mrf.mxu0
        %v859 = vadd.f32 0.0, %v858
        %v860 = vpop.f32.mrf.mxu0
        %861 = vmatprep.mubr.bf16.mxu0 0
        %862 = vmatmul.mubr.bf16.gmra.mxu0 %v738
        %v863 = vpop.f32.mrf.mxu0
        %v864 = vadd.f32 0.0, %v863
        %v865 = vpop.f32.mrf.mxu0
        %v866 = vpop.f32.mrf.mxu0
        %v867 = vadd.f32 0.0, %v866
        %v868 = vpop.f32.mrf.mxu0
        %869 = vmatprep.mubr.bf16.mxu0 0
        %870 = vmatmul.mubr.bf16.gmra.mxu0 %v741
        %v871 = vpop.f32.mrf.mxu0
        %v872 = vadd.f32 0.0, %v871
        %v873 = vpop.f32.mrf.mxu0
        %v874 = vpop.f32.mrf.mxu0
        %v875 = vadd.f32 0.0, %v874
        %v876 = vpop.f32.mrf.mxu0
        %877 = vmatprep.mubr.bf16.mxu0 0
        %878 = vmatmul.mubr.bf16.gmra.mxu0 %v744
        %v879 = vpop.f32.mrf.mxu0
        %v880 = vadd.f32 0.0, %v879
        %v881 = vpop.f32.mrf.mxu0
        %v882 = vpop.f32.mrf.mxu0
        %v883 = vadd.f32 0.0, %v882
        %v884 = vpop.f32.mrf.mxu0
        %885 = vmatprep.mubr.bf16.mxu0 0
        %886 = vmatmul.mubr.bf16.gmra.mxu0 %v747
        %v887 = vpop.f32.mrf.mxu0
        %v888 = vadd.f32 0.0, %v887
        %v889 = vpop.f32.mrf.mxu0
        %v890 = vpop.f32.mrf.mxu0
        %v891 = vadd.f32 0.0, %v890
        %v892 = vpop.f32.mrf.mxu0
        %893 = vmatprep.mubr.bf16.mxu0 0
        %894 = vmatmul.mubr.bf16.gmra.mxu0 %v750
        %v895 = vpop.f32.mrf.mxu0
        %v896 = vadd.f32 0.0, %v895
        %v897 = vpop.f32.mrf.mxu0
        %v898 = vpop.f32.mrf.mxu0
        %v899 = vadd.f32 0.0, %v898
        %v900 = vpop.f32.mrf.mxu0
        %901 = vmatprep.mubr.bf16.mxu0 0
        %902 = vmatmul.mubr.bf16.gmra.mxu0 %v753
        %v903 = vpop.f32.mrf.mxu0
        %v904 = vadd.f32 0.0, %v903
        %v905 = vpop.f32.mrf.mxu0
        %v906 = vpop.f32.mrf.mxu0
        %v907 = vadd.f32 0.0, %v906
        %v908 = vpop.f32.mrf.mxu0
        %909 = vmatprep.mubr.bf16.mxu0 0
        %910 = vmatmul.mubr.bf16.gmra.mxu0 %v756
        %v911 = vpop.f32.mrf.mxu0
        %v912 = vadd.f32 0.0, %v911
        %v913 = vpop.f32.mrf.mxu0
        %v914 = vpop.f32.mrf.mxu0
        %v915 = vadd.f32 0.0, %v914
        %v916 = vpop.f32.mrf.mxu0
        %917 = vmatprep.mubr.bf16.mxu0 0
        %918 = vmatmul.mubr.bf16.gmra.mxu0 %v759
        %v919 = vpop.f32.mrf.mxu0
        %v920 = vadd.f32 0.0, %v919
        %v921 = vpop.f32.mrf.mxu0
        %v922 = vpop.f32.mrf.mxu0
        %v923 = vadd.f32 0.0, %v922
        %v924 = vpop.f32.mrf.mxu0
        %925 = vdwg.mxu0
        %v926 = vpack.c.bf16 %v803, %v800
        %v927 = vpack.c.bf16 %v811, %v808
        %v928 = vpack.c.bf16 %v819, %v816
        %v929 = vpack.c.bf16 %v827, %v824
        %v930 = vpack.c.bf16 %v835, %v832
        %v931 = vpack.c.bf16 %v843, %v840
        %v932 = vpack.c.bf16 %v851, %v848
        %v933 = vpack.c.bf16 %v859, %v856
        %v934 = vpack.c.bf16 %v867, %v864
        %v935 = vpack.c.bf16 %v875, %v872
        %v936 = vpack.c.bf16 %v883, %v880
        %v937 = vpack.c.bf16 %v891, %v888
        %v938 = vpack.c.bf16 %v899, %v896
        %v939 = vpack.c.bf16 %v907, %v904
        %v940 = vpack.c.bf16 %v915, %v912
        %v941 = vpack.c.bf16 %v923, %v920
        %v942 = vld [vmem:[#allocation2] sm:$0xf]
        %v943 = vld [vmem:[#allocation2 + $0x4] sm:$0xf]
        %v944 = vld [vmem:[#allocation2 + $0x8] sm:$0xf]
        %v945 = vld [vmem:[#allocation2 + $0xc] sm:$0xf]
        %v946 = vld [vmem:[#allocation2 + $0x10] sm:$0xf]
        %v947 = vld [vmem:[#allocation2 + $0x14] sm:$0xf]
        %v948 = vld [vmem:[#allocation2 + $0x18] sm:$0xf]
        %v949 = vld [vmem:[#allocation2 + $0x1c] sm:$0xf]
        %v950 = vld [vmem:[#allocation2 + $0x20] sm:$0xf]
        %v951 = vld [vmem:[#allocation2 + $0x24] sm:$0xf]
        %v952 = vld [vmem:[#allocation2 + $0x28] sm:$0xf]
        %v953 = vld [vmem:[#allocation2 + $0x2c] sm:$0xf]
        %v954 = vld [vmem:[#allocation2 + $0x30] sm:$0xf]
        %v955 = vld [vmem:[#allocation2 + $0x34] sm:$0xf]
        %v956 = vld [vmem:[#allocation2 + $0x38] sm:$0xf]
        %v957 = vld [vmem:[#allocation2 + $0x3c] sm:$0xf]
        %958 = vxpose.xlu0.c.b16.start [1/8] %v926, 128
        %959 = vxpose.xlu0.c.b16.cont [2/8] %v927, 128
        %960 = vxpose.xlu0.c.b16.cont [3/8] 0, 128
        %961 = vxpose.xlu0.c.b16.cont [4/8] 0, 128
        %962 = vxpose.xlu0.c.b16.cont [5/8] 0, 128
        %963 = vxpose.xlu0.c.b16.cont [6/8] 0, 128
        %964 = vxpose.xlu0.c.b16.cont [7/8] 0, 128
        %965 = vxpose.xlu0.c.b16.end [8/8] 0, 128
        %v966 = vpop.trf.xlu0
        %v967 = vpop.trf.xlu0
        %v968 = vpop.trf.xlu0
        %v969 = vpop.trf.xlu0
        %v970 = vpop.trf.xlu0
        %v971 = vpop.trf.xlu0
        %v972 = vpop.trf.xlu0
        %v973 = vpop.trf.xlu0
        %v978 = vunpack.c.l.b16 %v942
        %v979 = vunpack.c.l.b16 %v943
        %v980 = vunpack.c.l.b16 %v944
        %v981 = vunpack.c.l.b16 %v945
        %v982 = vpack.c.b16 %v979, %v978
        %v983 = vpack.c.b16 %v981, %v980
        %vm986 = vcmask 261120
        %v988 = vsel %vm986, %v966, 0
        %v991 = vsel %vm986, %v967, 0
        %v994 = vsel %vm986, %v968, 0
        %v997 = vsel %vm986, %v969, 0
        %v1000 = vsel %vm986, %v970, 0
        %v1003 = vsel %vm986, %v971, 0
        %v1006 = vsel %vm986, %v972, 0
        %v1009 = vsel %vm986, %v973, 0
        %1011 = vmatprep.subr.bf16.mxu0 0
        %1012 = vmatpush1.bf16.msra.mxu0 0
        %1013 = vmatprep.subr.bf16.mxu0 0
        %1014 = vmatpush1.bf16.msra.mxu0 0
        %1015 = vmatprep.subr.bf16.mxu0 0
        %1016 = vmatpush1.bf16.msra.mxu0 0
        %1017 = vmatprep.subr.bf16.mxu0 0
        %1018 = vmatpush1.bf16.msra.mxu0 0
        %1019 = vmatprep.subr.bf16.mxu0 0
        %1020 = vmatpush1.bf16.msra.mxu0 0
        %1021 = vmatprep.subr.bf16.mxu0 0
        %1022 = vmatpush1.bf16.msra.mxu0 0
        %1023 = vmatprep.subr.bf16.mxu0 0
        %1024 = vmatpush1.bf16.msra.mxu0 %v983
        %1025 = vmatprep.subr.bf16.mxu0 0
        %1026 = vmatpush1.bf16.msra.mxu0 %v982
        %1027 = vmatprep.subr.bf16.mxu0 0
        %1028 = vmatpush2.bf16.msra.mxu0 0
        %1029 = vmatprep.subr.bf16.mxu0 0
        %1030 = vmatpush2.bf16.msra.mxu0 0
        %1031 = vmatprep.subr.bf16.mxu0 0
        %1032 = vmatpush2.bf16.msra.mxu0 0
        %1033 = vmatprep.subr.bf16.mxu0 0
        %1034 = vmatpush2.bf16.msra.mxu0 0
        %1035 = vmatprep.subr.bf16.mxu0 0
        %1036 = vmatpush2.bf16.msra.mxu0 0
        %1037 = vmatprep.subr.bf16.mxu0 0
        %1038 = vmatpush2.bf16.msra.mxu0 0
        %1039 = vmatprep.subr.bf16.mxu0 0
        %1040 = vmatpush2.bf16.msra.mxu0 0
        %1041 = vmatprep.subr.bf16.mxu0 0
        %1042 = vmatpush2.bf16.msra.mxu0 0
        %1043 = vmatprep.mubr.bf16.mxu0 0
        %1044 = vmatmul.mubr.bf16.gmra.mxu0 %v988
        %v1045 = vpop.f32.mrf.mxu0
        %v1046 = vadd.f32 0.0, %v1045
        %v1047 = vpop.f32.mrf.mxu0
        %v1048 = vpop.f32.mrf.mxu0
        %v1049 = vadd.f32 0.0, %v1048
        %v1050 = vpop.f32.mrf.mxu0
        %1051 = vmatprep.mubr.bf16.mxu0 0
        %1052 = vmatmul.mubr.bf16.gmra.mxu0 %v991
        %v1053 = vpop.f32.mrf.mxu0
        %v1054 = vadd.f32 0.0, %v1053
        %v1055 = vpop.f32.mrf.mxu0
        %v1056 = vpop.f32.mrf.mxu0
        %v1057 = vadd.f32 0.0, %v1056
        %v1058 = vpop.f32.mrf.mxu0
        %1059 = vmatprep.mubr.bf16.mxu0 0
        %1060 = vmatmul.mubr.bf16.gmra.mxu0 %v994
        %v1061 = vpop.f32.mrf.mxu0
        %v1062 = vadd.f32 0.0, %v1061
        %v1063 = vpop.f32.mrf.mxu0
        %v1064 = vpop.f32.mrf.mxu0
        %v1065 = vadd.f32 0.0, %v1064
        %v1066 = vpop.f32.mrf.mxu0
        %1067 = vmatprep.mubr.bf16.mxu0 0
        %1068 = vmatmul.mubr.bf16.gmra.mxu0 %v997
        %v1069 = vpop.f32.mrf.mxu0
        %v1070 = vadd.f32 0.0, %v1069
        %v1071 = vpop.f32.mrf.mxu0
        %v1072 = vpop.f32.mrf.mxu0
        %v1073 = vadd.f32 0.0, %v1072
        %v1074 = vpop.f32.mrf.mxu0
        %1075 = vmatprep.mubr.bf16.mxu0 0
        %1076 = vmatmul.mubr.bf16.gmra.mxu0 %v1000
        %v1077 = vpop.f32.mrf.mxu0
        %v1078 = vadd.f32 0.0, %v1077
        %v1079 = vpop.f32.mrf.mxu0
        %v1080 = vpop.f32.mrf.mxu0
        %v1081 = vadd.f32 0.0, %v1080
        %v1082 = vpop.f32.mrf.mxu0
        %1083 = vmatprep.mubr.bf16.mxu0 0
        %1084 = vmatmul.mubr.bf16.gmra.mxu0 %v1003
        %v1085 = vpop.f32.mrf.mxu0
        %v1086 = vadd.f32 0.0, %v1085
        %v1087 = vpop.f32.mrf.mxu0
        %v1088 = vpop.f32.mrf.mxu0
        %v1089 = vadd.f32 0.0, %v1088
        %v1090 = vpop.f32.mrf.mxu0
        %1091 = vmatprep.mubr.bf16.mxu0 0
        %1092 = vmatmul.mubr.bf16.gmra.mxu0 %v1006
        %v1093 = vpop.f32.mrf.mxu0
        %v1094 = vadd.f32 0.0, %v1093
        %v1095 = vpop.f32.mrf.mxu0
        %v1096 = vpop.f32.mrf.mxu0
        %v1097 = vadd.f32 0.0, %v1096
        %v1098 = vpop.f32.mrf.mxu0
        %1099 = vmatprep.mubr.bf16.mxu0 0
        %1100 = vmatmul.mubr.bf16.gmra.mxu0 %v1009
        %v1101 = vpop.f32.mrf.mxu0
        %v1102 = vadd.f32 0.0, %v1101
        %v1103 = vpop.f32.mrf.mxu0
        %v1104 = vpop.f32.mrf.mxu0
        %v1105 = vadd.f32 0.0, %v1104
        %v1106 = vpop.f32.mrf.mxu0
        %1107 = vdwg.mxu0
        %1108 = vxpose.xlu0.c.b16.start [1/8] %v928, 128
        %1109 = vxpose.xlu0.c.b16.cont [2/8] %v929, 128
        %1110 = vxpose.xlu0.c.b16.cont [3/8] 0, 128
        %1111 = vxpose.xlu0.c.b16.cont [4/8] 0, 128
        %1112 = vxpose.xlu0.c.b16.cont [5/8] 0, 128
        %1113 = vxpose.xlu0.c.b16.cont [6/8] 0, 128
        %1114 = vxpose.xlu0.c.b16.cont [7/8] 0, 128
        %1115 = vxpose.xlu0.c.b16.end [8/8] 0, 128
        %v1116 = vpop.trf.xlu0
        %v1117 = vpop.trf.xlu0
        %v1118 = vpop.trf.xlu0
        %v1119 = vpop.trf.xlu0
        %v1120 = vpop.trf.xlu0
        %v1121 = vpop.trf.xlu0
        %v1122 = vpop.trf.xlu0
        %v1123 = vpop.trf.xlu0
        %v1128 = vunpack.c.l.b16 %v946
        %v1129 = vunpack.c.l.b16 %v947
        %v1130 = vunpack.c.l.b16 %v948
        %v1131 = vunpack.c.l.b16 %v949
        %v1132 = vpack.c.b16 %v1129, %v1128
        %v1133 = vpack.c.b16 %v1131, %v1130
        %v1137 = vsel %vm986, %v1116, 0
        %v1140 = vsel %vm986, %v1117, 0
        %v1143 = vsel %vm986, %v1118, 0
        %v1146 = vsel %vm986, %v1119, 0
        %v1149 = vsel %vm986, %v1120, 0
        %v1152 = vsel %vm986, %v1121, 0
        %v1155 = vsel %vm986, %v1122, 0
        %v1158 = vsel %vm986, %v1123, 0
        %1160 = vmatprep.subr.bf16.mxu0 0
        %1161 = vmatpush1.bf16.msra.mxu0 0
        %1162 = vmatprep.subr.bf16.mxu0 0
        %1163 = vmatpush1.bf16.msra.mxu0 0
        %1164 = vmatprep.subr.bf16.mxu0 0
        %1165 = vmatpush1.bf16.msra.mxu0 0
        %1166 = vmatprep.subr.bf16.mxu0 0
        %1167 = vmatpush1.bf16.msra.mxu0 0
        %1168 = vmatprep.subr.bf16.mxu0 0
        %1169 = vmatpush1.bf16.msra.mxu0 0
        %1170 = vmatprep.subr.bf16.mxu0 0
        %1171 = vmatpush1.bf16.msra.mxu0 0
        %1172 = vmatprep.subr.bf16.mxu0 0
        %1173 = vmatpush1.bf16.msra.mxu0 %v1133
        %1174 = vmatprep.subr.bf16.mxu0 0
        %1175 = vmatpush1.bf16.msra.mxu0 %v1132
        %1176 = vmatprep.subr.bf16.mxu0 0
        %1177 = vmatpush2.bf16.msra.mxu0 0
        %1178 = vmatprep.subr.bf16.mxu0 0
        %1179 = vmatpush2.bf16.msra.mxu0 0
        %1180 = vmatprep.subr.bf16.mxu0 0
        %1181 = vmatpush2.bf16.msra.mxu0 0
        %1182 = vmatprep.subr.bf16.mxu0 0
        %1183 = vmatpush2.bf16.msra.mxu0 0
        %1184 = vmatprep.subr.bf16.mxu0 0
        %1185 = vmatpush2.bf16.msra.mxu0 0
        %1186 = vmatprep.subr.bf16.mxu0 0
        %1187 = vmatpush2.bf16.msra.mxu0 0
        %1188 = vmatprep.subr.bf16.mxu0 0
        %1189 = vmatpush2.bf16.msra.mxu0 0
        %1190 = vmatprep.subr.bf16.mxu0 0
        %1191 = vmatpush2.bf16.msra.mxu0 0
        %1192 = vmatprep.mubr.bf16.mxu0 0
        %1193 = vmatmul.mubr.bf16.gmra.mxu0 %v1137
        %v1194 = vpop.f32.mrf.mxu0
        %v1195 = vadd.f32 0.0, %v1194
        %v1196 = vpop.f32.mrf.mxu0
        %v1197 = vpop.f32.mrf.mxu0
        %v1198 = vadd.f32 0.0, %v1197
        %v1199 = vpop.f32.mrf.mxu0
        %1200 = vmatprep.mubr.bf16.mxu0 0
        %1201 = vmatmul.mubr.bf16.gmra.mxu0 %v1140
        %v1202 = vpop.f32.mrf.mxu0
        %v1203 = vadd.f32 0.0, %v1202
        %v1204 = vpop.f32.mrf.mxu0
        %v1205 = vpop.f32.mrf.mxu0
        %v1206 = vadd.f32 0.0, %v1205
        %v1207 = vpop.f32.mrf.mxu0
        %1208 = vmatprep.mubr.bf16.mxu0 0
        %1209 = vmatmul.mubr.bf16.gmra.mxu0 %v1143
        %v1210 = vpop.f32.mrf.mxu0
        %v1211 = vadd.f32 0.0, %v1210
        %v1212 = vpop.f32.mrf.mxu0
        %v1213 = vpop.f32.mrf.mxu0
        %v1214 = vadd.f32 0.0, %v1213
        %v1215 = vpop.f32.mrf.mxu0
        %1216 = vmatprep.mubr.bf16.mxu0 0
        %1217 = vmatmul.mubr.bf16.gmra.mxu0 %v1146
        %v1218 = vpop.f32.mrf.mxu0
        %v1219 = vadd.f32 0.0, %v1218
        %v1220 = vpop.f32.mrf.mxu0
        %v1221 = vpop.f32.mrf.mxu0
        %v1222 = vadd.f32 0.0, %v1221
        %v1223 = vpop.f32.mrf.mxu0
        %1224 = vmatprep.mubr.bf16.mxu0 0
        %1225 = vmatmul.mubr.bf16.gmra.mxu0 %v1149
        %v1226 = vpop.f32.mrf.mxu0
        %v1227 = vadd.f32 0.0, %v1226
        %v1228 = vpop.f32.mrf.mxu0
        %v1229 = vpop.f32.mrf.mxu0
        %v1230 = vadd.f32 0.0, %v1229
        %v1231 = vpop.f32.mrf.mxu0
        %1232 = vmatprep.mubr.bf16.mxu0 0
        %1233 = vmatmul.mubr.bf16.gmra.mxu0 %v1152
        %v1234 = vpop.f32.mrf.mxu0
        %v1235 = vadd.f32 0.0, %v1234
        %v1236 = vpop.f32.mrf.mxu0
        %v1237 = vpop.f32.mrf.mxu0
        %v1238 = vadd.f32 0.0, %v1237
        %v1239 = vpop.f32.mrf.mxu0
        %1240 = vmatprep.mubr.bf16.mxu0 0
        %1241 = vmatmul.mubr.bf16.gmra.mxu0 %v1155
        %v1242 = vpop.f32.mrf.mxu0
        %v1243 = vadd.f32 0.0, %v1242
        %v1244 = vpop.f32.mrf.mxu0
        %v1245 = vpop.f32.mrf.mxu0
        %v1246 = vadd.f32 0.0, %v1245
        %v1247 = vpop.f32.mrf.mxu0
        %1248 = vmatprep.mubr.bf16.mxu0 0
        %1249 = vmatmul.mubr.bf16.gmra.mxu0 %v1158
        %v1250 = vpop.f32.mrf.mxu0
        %v1251 = vadd.f32 0.0, %v1250
        %v1252 = vpop.f32.mrf.mxu0
        %v1253 = vpop.f32.mrf.mxu0
        %v1254 = vadd.f32 0.0, %v1253
        %v1255 = vpop.f32.mrf.mxu0
        %1256 = vdwg.mxu0
        %1257 = vxpose.xlu0.c.b16.start [1/8] %v930, 128
        %1258 = vxpose.xlu0.c.b16.cont [2/8] %v931, 128
        %1259 = vxpose.xlu0.c.b16.cont [3/8] 0, 128
        %1260 = vxpose.xlu0.c.b16.cont [4/8] 0, 128
        %1261 = vxpose.xlu0.c.b16.cont [5/8] 0, 128
        %1262 = vxpose.xlu0.c.b16.cont [6/8] 0, 128
        %1263 = vxpose.xlu0.c.b16.cont [7/8] 0, 128
        %1264 = vxpose.xlu0.c.b16.end [8/8] 0, 128
        %v1265 = vpop.trf.xlu0
        %v1266 = vpop.trf.xlu0
        %v1267 = vpop.trf.xlu0
        %v1268 = vpop.trf.xlu0
        %v1269 = vpop.trf.xlu0
        %v1270 = vpop.trf.xlu0
        %v1271 = vpop.trf.xlu0
        %v1272 = vpop.trf.xlu0
        %v1277 = vunpack.c.l.b16 %v950
        %v1278 = vunpack.c.l.b16 %v951
        %v1279 = vunpack.c.l.b16 %v952
        %v1280 = vunpack.c.l.b16 %v953
        %v1281 = vpack.c.b16 %v1278, %v1277
        %v1282 = vpack.c.b16 %v1280, %v1279
        %v1286 = vsel %vm986, %v1265, 0
        %v1289 = vsel %vm986, %v1266, 0
        %v1292 = vsel %vm986, %v1267, 0
        %v1295 = vsel %vm986, %v1268, 0
        %v1298 = vsel %vm986, %v1269, 0
        %v1301 = vsel %vm986, %v1270, 0
        %v1304 = vsel %vm986, %v1271, 0
        %v1307 = vsel %vm986, %v1272, 0
        %1309 = vmatprep.subr.bf16.mxu0 0
        %1310 = vmatpush1.bf16.msra.mxu0 0
        %1311 = vmatprep.subr.bf16.mxu0 0
        %1312 = vmatpush1.bf16.msra.mxu0 0
        %1313 = vmatprep.subr.bf16.mxu0 0
        %1314 = vmatpush1.bf16.msra.mxu0 0
        %1315 = vmatprep.subr.bf16.mxu0 0
        %1316 = vmatpush1.bf16.msra.mxu0 0
        %1317 = vmatprep.subr.bf16.mxu0 0
        %1318 = vmatpush1.bf16.msra.mxu0 0
        %1319 = vmatprep.subr.bf16.mxu0 0
        %1320 = vmatpush1.bf16.msra.mxu0 0
        %1321 = vmatprep.subr.bf16.mxu0 0
        %1322 = vmatpush1.bf16.msra.mxu0 %v1282
        %1323 = vmatprep.subr.bf16.mxu0 0
        %1324 = vmatpush1.bf16.msra.mxu0 %v1281
        %1325 = vmatprep.subr.bf16.mxu0 0
        %1326 = vmatpush2.bf16.msra.mxu0 0
        %1327 = vmatprep.subr.bf16.mxu0 0
        %1328 = vmatpush2.bf16.msra.mxu0 0
        %1329 = vmatprep.subr.bf16.mxu0 0
        %1330 = vmatpush2.bf16.msra.mxu0 0
        %1331 = vmatprep.subr.bf16.mxu0 0
        %1332 = vmatpush2.bf16.msra.mxu0 0
        %1333 = vmatprep.subr.bf16.mxu0 0
        %1334 = vmatpush2.bf16.msra.mxu0 0
        %1335 = vmatprep.subr.bf16.mxu0 0
        %1336 = vmatpush2.bf16.msra.mxu0 0
        %1337 = vmatprep.subr.bf16.mxu0 0
        %1338 = vmatpush2.bf16.msra.mxu0 0
        %1339 = vmatprep.subr.bf16.mxu0 0
        %1340 = vmatpush2.bf16.msra.mxu0 0
        %1341 = vmatprep.mubr.bf16.mxu0 0
        %1342 = vmatmul.mubr.bf16.gmra.mxu0 %v1286
        %v1343 = vpop.f32.mrf.mxu0
        %v1344 = vadd.f32 0.0, %v1343
        %v1345 = vpop.f32.mrf.mxu0
        %v1346 = vpop.f32.mrf.mxu0
        %v1347 = vadd.f32 0.0, %v1346
        %v1348 = vpop.f32.mrf.mxu0
        %1349 = vmatprep.mubr.bf16.mxu0 0
        %1350 = vmatmul.mubr.bf16.gmra.mxu0 %v1289
        %v1351 = vpop.f32.mrf.mxu0
        %v1352 = vadd.f32 0.0, %v1351
        %v1353 = vpop.f32.mrf.mxu0
        %v1354 = vpop.f32.mrf.mxu0
        %v1355 = vadd.f32 0.0, %v1354
        %v1356 = vpop.f32.mrf.mxu0
        %1357 = vmatprep.mubr.bf16.mxu0 0
        %1358 = vmatmul.mubr.bf16.gmra.mxu0 %v1292
        %v1359 = vpop.f32.mrf.mxu0
        %v1360 = vadd.f32 0.0, %v1359
        %v1361 = vpop.f32.mrf.mxu0
        %v1362 = vpop.f32.mrf.mxu0
        %v1363 = vadd.f32 0.0, %v1362
        %v1364 = vpop.f32.mrf.mxu0
        %1365 = vmatprep.mubr.bf16.mxu0 0
        %1366 = vmatmul.mubr.bf16.gmra.mxu0 %v1295
        %v1367 = vpop.f32.mrf.mxu0
        %v1368 = vadd.f32 0.0, %v1367
        %v1369 = vpop.f32.mrf.mxu0
        %v1370 = vpop.f32.mrf.mxu0
        %v1371 = vadd.f32 0.0, %v1370
        %v1372 = vpop.f32.mrf.mxu0
        %1373 = vmatprep.mubr.bf16.mxu0 0
        %1374 = vmatmul.mubr.bf16.gmra.mxu0 %v1298
        %v1375 = vpop.f32.mrf.mxu0
        %v1376 = vadd.f32 0.0, %v1375
        %v1377 = vpop.f32.mrf.mxu0
        %v1378 = vpop.f32.mrf.mxu0
        %v1379 = vadd.f32 0.0, %v1378
        %v1380 = vpop.f32.mrf.mxu0
        %1381 = vmatprep.mubr.bf16.mxu0 0
        %1382 = vmatmul.mubr.bf16.gmra.mxu0 %v1301
        %v1383 = vpop.f32.mrf.mxu0
        %v1384 = vadd.f32 0.0, %v1383
        %v1385 = vpop.f32.mrf.mxu0
        %v1386 = vpop.f32.mrf.mxu0
        %v1387 = vadd.f32 0.0, %v1386
        %v1388 = vpop.f32.mrf.mxu0
        %1389 = vmatprep.mubr.bf16.mxu0 0
        %1390 = vmatmul.mubr.bf16.gmra.mxu0 %v1304
        %v1391 = vpop.f32.mrf.mxu0
        %v1392 = vadd.f32 0.0, %v1391
        %v1393 = vpop.f32.mrf.mxu0
        %v1394 = vpop.f32.mrf.mxu0
        %v1395 = vadd.f32 0.0, %v1394
        %v1396 = vpop.f32.mrf.mxu0
        %1397 = vmatprep.mubr.bf16.mxu0 0
        %1398 = vmatmul.mubr.bf16.gmra.mxu0 %v1307
        %v1399 = vpop.f32.mrf.mxu0
        %v1400 = vadd.f32 0.0, %v1399
        %v1401 = vpop.f32.mrf.mxu0
        %v1402 = vpop.f32.mrf.mxu0
        %v1403 = vadd.f32 0.0, %v1402
        %v1404 = vpop.f32.mrf.mxu0
        %1405 = vdwg.mxu0
        %1406 = vxpose.xlu0.c.b16.start [1/8] %v932, 128
        %1407 = vxpose.xlu0.c.b16.cont [2/8] %v933, 128
        %1408 = vxpose.xlu0.c.b16.cont [3/8] 0, 128
        %1409 = vxpose.xlu0.c.b16.cont [4/8] 0, 128
        %1410 = vxpose.xlu0.c.b16.cont [5/8] 0, 128
        %1411 = vxpose.xlu0.c.b16.cont [6/8] 0, 128
        %1412 = vxpose.xlu0.c.b16.cont [7/8] 0, 128
        %1413 = vxpose.xlu0.c.b16.end [8/8] 0, 128
        %v1414 = vpop.trf.xlu0
        %v1415 = vpop.trf.xlu0
        %v1416 = vpop.trf.xlu0
        %v1417 = vpop.trf.xlu0
        %v1418 = vpop.trf.xlu0
        %v1419 = vpop.trf.xlu0
        %v1420 = vpop.trf.xlu0
        %v1421 = vpop.trf.xlu0
        %v1426 = vunpack.c.l.b16 %v954
        %v1427 = vunpack.c.l.b16 %v955
        %v1428 = vunpack.c.l.b16 %v956
        %v1429 = vunpack.c.l.b16 %v957
        %v1430 = vpack.c.b16 %v1427, %v1426
        %v1431 = vpack.c.b16 %v1429, %v1428
        %v1435 = vsel %vm986, %v1414, 0
        %v1438 = vsel %vm986, %v1415, 0
        %v1441 = vsel %vm986, %v1416, 0
        %v1444 = vsel %vm986, %v1417, 0
        %v1447 = vsel %vm986, %v1418, 0
        %v1450 = vsel %vm986, %v1419, 0
        %v1453 = vsel %vm986, %v1420, 0
        %v1456 = vsel %vm986, %v1421, 0
        %1458 = vmatprep.subr.bf16.mxu0 0
        %1459 = vmatpush1.bf16.msra.mxu0 0
        %1460 = vmatprep.subr.bf16.mxu0 0
        %1461 = vmatpush1.bf16.msra.mxu0 0
        %1462 = vmatprep.subr.bf16.mxu0 0
        %1463 = vmatpush1.bf16.msra.mxu0 0
        %1464 = vmatprep.subr.bf16.mxu0 0
        %1465 = vmatpush1.bf16.msra.mxu0 0
        %1466 = vmatprep.subr.bf16.mxu0 0
        %1467 = vmatpush1.bf16.msra.mxu0 0
        %1468 = vmatprep.subr.bf16.mxu0 0
        %1469 = vmatpush1.bf16.msra.mxu0 0
        %1470 = vmatprep.subr.bf16.mxu0 0
        %1471 = vmatpush1.bf16.msra.mxu0 %v1431
        %1472 = vmatprep.subr.bf16.mxu0 0
        %1473 = vmatpush1.bf16.msra.mxu0 %v1430
        %1474 = vmatprep.subr.bf16.mxu0 0
        %1475 = vmatpush2.bf16.msra.mxu0 0
        %1476 = vmatprep.subr.bf16.mxu0 0
        %1477 = vmatpush2.bf16.msra.mxu0 0
        %1478 = vmatprep.subr.bf16.mxu0 0
        %1479 = vmatpush2.bf16.msra.mxu0 0
        %1480 = vmatprep.subr.bf16.mxu0 0
        %1481 = vmatpush2.bf16.msra.mxu0 0
        %1482 = vmatprep.subr.bf16.mxu0 0
        %1483 = vmatpush2.bf16.msra.mxu0 0
        %1484 = vmatprep.subr.bf16.mxu0 0
        %1485 = vmatpush2.bf16.msra.mxu0 0
        %1486 = vmatprep.subr.bf16.mxu0 0
        %1487 = vmatpush2.bf16.msra.mxu0 0
        %1488 = vmatprep.subr.bf16.mxu0 0
        %1489 = vmatpush2.bf16.msra.mxu0 0
        %1490 = vmatprep.mubr.bf16.mxu0 0
        %1491 = vmatmul.mubr.bf16.gmra.mxu0 %v1435
        %v1492 = vpop.f32.mrf.mxu0
        %v1493 = vadd.f32 0.0, %v1492
        %v1494 = vpop.f32.mrf.mxu0
        %v1495 = vpop.f32.mrf.mxu0
        %v1496 = vadd.f32 0.0, %v1495
        %v1497 = vpop.f32.mrf.mxu0
        %1498 = vmatprep.mubr.bf16.mxu0 0
        %1499 = vmatmul.mubr.bf16.gmra.mxu0 %v1438
        %v1500 = vpop.f32.mrf.mxu0
        %v1501 = vadd.f32 0.0, %v1500
        %v1502 = vpop.f32.mrf.mxu0
        %v1503 = vpop.f32.mrf.mxu0
        %v1504 = vadd.f32 0.0, %v1503
        %v1505 = vpop.f32.mrf.mxu0
        %1506 = vmatprep.mubr.bf16.mxu0 0
        %1507 = vmatmul.mubr.bf16.gmra.mxu0 %v1441
        %v1508 = vpop.f32.mrf.mxu0
        %v1509 = vadd.f32 0.0, %v1508
        %v1510 = vpop.f32.mrf.mxu0
        %v1511 = vpop.f32.mrf.mxu0
        %v1512 = vadd.f32 0.0, %v1511
        %v1513 = vpop.f32.mrf.mxu0
        %1514 = vmatprep.mubr.bf16.mxu0 0
        %1515 = vmatmul.mubr.bf16.gmra.mxu0 %v1444
        %v1516 = vpop.f32.mrf.mxu0
        %v1517 = vadd.f32 0.0, %v1516
        %v1518 = vpop.f32.mrf.mxu0
        %v1519 = vpop.f32.mrf.mxu0
        %v1520 = vadd.f32 0.0, %v1519
        %v1521 = vpop.f32.mrf.mxu0
        %1522 = vmatprep.mubr.bf16.mxu0 0
        %1523 = vmatmul.mubr.bf16.gmra.mxu0 %v1447
        %v1524 = vpop.f32.mrf.mxu0
        %v1525 = vadd.f32 0.0, %v1524
        %v1526 = vpop.f32.mrf.mxu0
        %v1527 = vpop.f32.mrf.mxu0
        %v1528 = vadd.f32 0.0, %v1527
        %v1529 = vpop.f32.mrf.mxu0
        %1530 = vmatprep.mubr.bf16.mxu0 0
        %1531 = vmatmul.mubr.bf16.gmra.mxu0 %v1450
        %v1532 = vpop.f32.mrf.mxu0
        %v1533 = vadd.f32 0.0, %v1532
        %v1534 = vpop.f32.mrf.mxu0
        %v1535 = vpop.f32.mrf.mxu0
        %v1536 = vadd.f32 0.0, %v1535
        %v1537 = vpop.f32.mrf.mxu0
        %1538 = vmatprep.mubr.bf16.mxu0 0
        %1539 = vmatmul.mubr.bf16.gmra.mxu0 %v1453
        %v1540 = vpop.f32.mrf.mxu0
        %v1541 = vadd.f32 0.0, %v1540
        %v1542 = vpop.f32.mrf.mxu0
        %v1543 = vpop.f32.mrf.mxu0
        %v1544 = vadd.f32 0.0, %v1543
        %v1545 = vpop.f32.mrf.mxu0
        %1546 = vmatprep.mubr.bf16.mxu0 0
        %1547 = vmatmul.mubr.bf16.gmra.mxu0 %v1456
        %v1548 = vpop.f32.mrf.mxu0
        %v1549 = vadd.f32 0.0, %v1548
        %v1550 = vpop.f32.mrf.mxu0
        %v1551 = vpop.f32.mrf.mxu0
        %v1552 = vadd.f32 0.0, %v1551
        %v1553 = vpop.f32.mrf.mxu0
        %1554 = vdwg.mxu0
        %s1555 = smul.u32 %s27, 128
        %s1556 = ssub.s32 16, %s1555
        %v1557 = vlaneseq
        %v1558 = vshrl.u32 %v1557, 7
        %v1559 = vadd.s32 %v1558, 8
        %v1560 = vadd.s32 %v1558, 16
        %v1561 = vadd.s32 %v1558, 24
        %v1562 = vadd.s32 %v1558, 32
        %v1563 = vadd.s32 %v1558, 40
        %v1564 = vadd.s32 %v1558, 48
        %v1565 = vadd.s32 %v1558, 56
        %v1566 = vadd.s32 %v1558, 64
        %v1567 = vadd.s32 %v1558, 72
        %v1568 = vadd.s32 %v1558, 80
        %v1569 = vadd.s32 %v1558, 88
        %v1570 = vadd.s32 %v1558, 96
        %v1571 = vadd.s32 %v1558, 104
        %v1572 = vadd.s32 %v1558, 112
        %v1573 = vadd.s32 %v1558, 120
        %v1574 = vstv %s1556
        %vm1575 = vcmp.lt.s32.totalorder %v1558, %v1574
        %vm1576 = vcmp.lt.s32.totalorder %v1559, %v1574
        %vm1577 = vcmp.lt.s32.totalorder %v1560, %v1574
        %vm1578 = vcmp.lt.s32.totalorder %v1561, %v1574
        %vm1579 = vcmp.lt.s32.totalorder %v1562, %v1574
        %vm1580 = vcmp.lt.s32.totalorder %v1563, %v1574
        %vm1581 = vcmp.lt.s32.totalorder %v1564, %v1574
        %vm1582 = vcmp.lt.s32.totalorder %v1565, %v1574
        %vm1583 = vcmp.lt.s32.totalorder %v1566, %v1574
        %vm1584 = vcmp.lt.s32.totalorder %v1567, %v1574
        %vm1585 = vcmp.lt.s32.totalorder %v1568, %v1574
        %vm1586 = vcmp.lt.s32.totalorder %v1569, %v1574
        %vm1587 = vcmp.lt.s32.totalorder %v1570, %v1574
        %vm1588 = vcmp.lt.s32.totalorder %v1571, %v1574
        %vm1589 = vcmp.lt.s32.totalorder %v1572, %v1574
        %vm1590 = vcmp.lt.s32.totalorder %v1573, %v1574
        %v1591 = vsel %vm1575, 1, 0
        %v1592 = vsel %vm1576, 1, 0
        %v1593 = vsel %vm1577, 1, 0
        %v1594 = vsel %vm1578, 1, 0
        %v1595 = vsel %vm1579, 1, 0
        %v1596 = vsel %vm1580, 1, 0
        %v1597 = vsel %vm1581, 1, 0
        %v1598 = vsel %vm1582, 1, 0
        %v1599 = vsel %vm1583, 1, 0
        %v1600 = vsel %vm1584, 1, 0
        %v1601 = vsel %vm1585, 1, 0
        %v1602 = vsel %vm1586, 1, 0
        %v1603 = vsel %vm1587, 1, 0
        %v1604 = vsel %vm1588, 1, 0
        %v1605 = vsel %vm1589, 1, 0
        %v1606 = vsel %vm1590, 1, 0
        %vm1607 = vcmp.eq.s32.totalorder %v1591, 1
        %vm1608 = vcmp.eq.s32.totalorder %v1592, 1
        %vm1609 = vcmp.eq.s32.totalorder %v1593, 1
        %vm1610 = vcmp.eq.s32.totalorder %v1594, 1
        %vm1611 = vcmp.eq.s32.totalorder %v1595, 1
        %vm1612 = vcmp.eq.s32.totalorder %v1596, 1
        %vm1613 = vcmp.eq.s32.totalorder %v1597, 1
        %vm1614 = vcmp.eq.s32.totalorder %v1598, 1
        %vm1615 = vcmp.eq.s32.totalorder %v1599, 1
        %vm1616 = vcmp.eq.s32.totalorder %v1600, 1
        %vm1617 = vcmp.eq.s32.totalorder %v1601, 1
        %vm1618 = vcmp.eq.s32.totalorder %v1602, 1
        %vm1619 = vcmp.eq.s32.totalorder %v1603, 1
        %vm1620 = vcmp.eq.s32.totalorder %v1604, 1
        %vm1621 = vcmp.eq.s32.totalorder %v1605, 1
        %vm1622 = vcmp.eq.s32.totalorder %v1606, 1
        %v1623 = vsel %vm1607, %v1046, -inf
        %v1624 = vsel %vm1608, %v1049, -inf
        %v1625 = vsel %vm1609, %v1054, -inf
        %v1626 = vsel %vm1610, %v1057, -inf
        %v1627 = vsel %vm1611, %v1062, -inf
        %v1628 = vsel %vm1612, %v1065, -inf
        %v1629 = vsel %vm1613, %v1070, -inf
        %v1630 = vsel %vm1614, %v1073, -inf
        %v1631 = vsel %vm1615, %v1078, -inf
        %v1632 = vsel %vm1616, %v1081, -inf
        %v1633 = vsel %vm1617, %v1086, -inf
        %v1634 = vsel %vm1618, %v1089, -inf
        %v1635 = vsel %vm1619, %v1094, -inf
        %v1636 = vsel %vm1620, %v1097, -inf
        %v1637 = vsel %vm1621, %v1102, -inf
        %v1638 = vsel %vm1622, %v1105, -inf
        %v1639 = vsel %vm1607, %v1195, -inf
        %v1640 = vsel %vm1608, %v1198, -inf
        %v1641 = vsel %vm1609, %v1203, -inf
        %v1642 = vsel %vm1610, %v1206, -inf
        %v1643 = vsel %vm1611, %v1211, -inf
        %v1644 = vsel %vm1612, %v1214, -inf
        %v1645 = vsel %vm1613, %v1219, -inf
        %v1646 = vsel %vm1614, %v1222, -inf
        %v1647 = vsel %vm1615, %v1227, -inf
        %v1648 = vsel %vm1616, %v1230, -inf
        %v1649 = vsel %vm1617, %v1235, -inf
        %v1650 = vsel %vm1618, %v1238, -inf
        %v1651 = vsel %vm1619, %v1243, -inf
        %v1652 = vsel %vm1620, %v1246, -inf
        %v1653 = vsel %vm1621, %v1251, -inf
        %v1654 = vsel %vm1622, %v1254, -inf
        %v1655 = vsel %vm1607, %v1344, -inf
        %v1656 = vsel %vm1608, %v1347, -inf
        %v1657 = vsel %vm1609, %v1352, -inf
        %v1658 = vsel %vm1610, %v1355, -inf
        %v1659 = vsel %vm1611, %v1360, -inf
        %v1660 = vsel %vm1612, %v1363, -inf
        %v1661 = vsel %vm1613, %v1368, -inf
        %v1662 = vsel %vm1614, %v1371, -inf
        %v1663 = vsel %vm1615, %v1376, -inf
        %v1664 = vsel %vm1616, %v1379, -inf
        %v1665 = vsel %vm1617, %v1384, -inf
        %v1666 = vsel %vm1618, %v1387, -inf
        %v1667 = vsel %vm1619, %v1392, -inf
        %v1668 = vsel %vm1620, %v1395, -inf
        %v1669 = vsel %vm1621, %v1400, -inf
        %v1670 = vsel %vm1622, %v1403, -inf
        %v1671 = vsel %vm1607, %v1493, -inf
        %v1672 = vsel %vm1608, %v1496, -inf
        %v1673 = vsel %vm1609, %v1501, -inf
        %v1674 = vsel %vm1610, %v1504, -inf
        %v1675 = vsel %vm1611, %v1509, -inf
        %v1676 = vsel %vm1612, %v1512, -inf
        %v1677 = vsel %vm1613, %v1517, -inf
        %v1678 = vsel %vm1614, %v1520, -inf
        %v1679 = vsel %vm1615, %v1525, -inf
        %v1680 = vsel %vm1616, %v1528, -inf
        %v1681 = vsel %vm1617, %v1533, -inf
        %v1682 = vsel %vm1618, %v1536, -inf
        %v1683 = vsel %vm1619, %v1541, -inf
        %v1684 = vsel %vm1620, %v1544, -inf
        %v1685 = vsel %vm1621, %v1549, -inf
        %v1686 = vsel %vm1622, %v1552, -inf
        %v1687 = vld [vmem:[#allocation3] sm:$0x1]
        %v1688 = vld [vmem:[#allocation3 + $0x1] sm:$0x1]
        %v1689 = vld [vmem:[#allocation3 + $0x2] sm:$0x1]
        %v1690 = vld [vmem:[#allocation3 + $0x3] sm:$0x1]
        %v1691 = vmax.f32 %v1623, %v1624
        %v1692 = vmax.f32 %v1691, %v1625
        %v1693 = vmax.f32 %v1692, %v1626
        %v1694 = vmax.f32 %v1693, %v1627
        %v1695 = vmax.f32 %v1694, %v1628
        %v1696 = vmax.f32 %v1695, %v1629
        %v1697 = vmax.f32 %v1696, %v1630
        %v1698 = vmax.f32 %v1697, %v1631
        %v1699 = vmax.f32 %v1698, %v1632
        %v1700 = vmax.f32 %v1699, %v1633
        %v1701 = vmax.f32 %v1700, %v1634
        %v1702 = vmax.f32 %v1701, %v1635
        %v1703 = vmax.f32 %v1702, %v1636
        %v1704 = vmax.f32 %v1703, %v1637
        %v1705 = vmax.f32 %v1704, %v1638
        %v1706 = vrot.slane %v1705, 4
        %v1707 = vmax.f32 %v1705, %v1706
        %v1708 = vrot.slane %v1707, 2
        %v1709 = vmax.f32 %v1707, %v1708
        %v1710 = vrot.slane %v1709, 1
        %v1711 = vmax.f32 %v1709, %v1710
        %v1712 = vmax.f32 %v1639, %v1640
        %v1713 = vmax.f32 %v1712, %v1641
        %v1714 = vmax.f32 %v1713, %v1642
        %v1715 = vmax.f32 %v1714, %v1643
        %v1716 = vmax.f32 %v1715, %v1644
        %v1717 = vmax.f32 %v1716, %v1645
        %v1718 = vmax.f32 %v1717, %v1646
        %v1719 = vmax.f32 %v1718, %v1647
        %v1720 = vmax.f32 %v1719, %v1648
        %v1721 = vmax.f32 %v1720, %v1649
        %v1722 = vmax.f32 %v1721, %v1650
        %v1723 = vmax.f32 %v1722, %v1651
        %v1724 = vmax.f32 %v1723, %v1652
        %v1725 = vmax.f32 %v1724, %v1653
        %v1726 = vmax.f32 %v1725, %v1654
        %v1727 = vrot.slane %v1726, 4
        %v1728 = vmax.f32 %v1726, %v1727
        %v1729 = vrot.slane %v1728, 2
        %v1730 = vmax.f32 %v1728, %v1729
        %v1731 = vrot.slane %v1730, 1
        %v1732 = vmax.f32 %v1730, %v1731
        %v1733 = vmax.f32 %v1655, %v1656
        %v1734 = vmax.f32 %v1733, %v1657
        %v1735 = vmax.f32 %v1734, %v1658
        %v1736 = vmax.f32 %v1735, %v1659
        %v1737 = vmax.f32 %v1736, %v1660
        %v1738 = vmax.f32 %v1737, %v1661
        %v1739 = vmax.f32 %v1738, %v1662
        %v1740 = vmax.f32 %v1739, %v1663
        %v1741 = vmax.f32 %v1740, %v1664
        %v1742 = vmax.f32 %v1741, %v1665
        %v1743 = vmax.f32 %v1742, %v1666
        %v1744 = vmax.f32 %v1743, %v1667
        %v1745 = vmax.f32 %v1744, %v1668
        %v1746 = vmax.f32 %v1745, %v1669
        %v1747 = vmax.f32 %v1746, %v1670
        %v1748 = vrot.slane %v1747, 4
        %v1749 = vmax.f32 %v1747, %v1748
        %v1750 = vrot.slane %v1749, 2
        %v1751 = vmax.f32 %v1749, %v1750
        %v1752 = vrot.slane %v1751, 1
        %v1753 = vmax.f32 %v1751, %v1752
        %v1754 = vmax.f32 %v1671, %v1672
        %v1755 = vmax.f32 %v1754, %v1673
        %v1756 = vmax.f32 %v1755, %v1674
        %v1757 = vmax.f32 %v1756, %v1675
        %v1758 = vmax.f32 %v1757, %v1676
        %v1759 = vmax.f32 %v1758, %v1677
        %v1760 = vmax.f32 %v1759, %v1678
        %v1761 = vmax.f32 %v1760, %v1679
        %v1762 = vmax.f32 %v1761, %v1680
        %v1763 = vmax.f32 %v1762, %v1681
        %v1764 = vmax.f32 %v1763, %v1682
        %v1765 = vmax.f32 %v1764, %v1683
        %v1766 = vmax.f32 %v1765, %v1684
        %v1767 = vmax.f32 %v1766, %v1685
        %v1768 = vmax.f32 %v1767, %v1686
        %v1769 = vrot.slane %v1768, 4
        %v1770 = vmax.f32 %v1768, %v1769
        %v1771 = vrot.slane %v1770, 2
        %v1772 = vmax.f32 %v1770, %v1771
        %v1773 = vrot.slane %v1772, 1
        %v1774 = vmax.f32 %v1772, %v1773
        %v1775 = vmax.f32 %v1687, %v1711
        %v1776 = vmax.f32 %v1688, %v1732
        %v1777 = vmax.f32 %v1689, %v1753
        %v1778 = vmax.f32 %v1690, %v1774
        %v1779 = vsub.f32 %v1687, %v1775
        %v1780 = vsub.f32 %v1688, %v1776
        %v1781 = vsub.f32 %v1689, %v1777
        %v1782 = vsub.f32 %v1690, %v1778
        %v1783 = vmul.f32 %v1779, 1.442695
        %v1784 = vpow.pop %v1783
        %v1785 = vmul.f32 %v1780, 1.442695
        %v1786 = vpow.pop %v1785
        %v1787 = vmul.f32 %v1781, 1.442695
        %v1788 = vpow.pop %v1787
        %v1789 = vmul.f32 %v1782, 1.442695
        %v1790 = vpow.pop %v1789
        %v1795 = vlaneseq
        %v1796 = vshrl.u32 %v1795, 7
        %v1797 = vsub.s32 0, %v1796
        %v1798 = vrot.slane %v1775, %v1797
        %v1799 = vlaneseq
        %v1800 = vshrl.u32 %v1799, 7
        %v1801 = vsub.s32 0, %v1800
        %v1802 = vrot.slane %v1776, %v1801
        %v1803 = vlaneseq
        %v1804 = vshrl.u32 %v1803, 7
        %v1805 = vsub.s32 0, %v1804
        %v1806 = vrot.slane %v1777, %v1805
        %v1807 = vlaneseq
        %v1808 = vshrl.u32 %v1807, 7
        %v1809 = vsub.s32 0, %v1808
        %v1810 = vrot.slane %v1778, %v1809
        %v1815 = vsub.f32 %v1623, %v1798
        %v1816 = vsub.f32 %v1624, %v1798
        %v1817 = vsub.f32 %v1625, %v1798
        %v1818 = vsub.f32 %v1626, %v1798
        %v1819 = vsub.f32 %v1627, %v1798
        %v1820 = vsub.f32 %v1628, %v1798
        %v1821 = vsub.f32 %v1629, %v1798
        %v1822 = vsub.f32 %v1630, %v1798
        %v1823 = vsub.f32 %v1631, %v1798
        %v1824 = vsub.f32 %v1632, %v1798
        %v1825 = vsub.f32 %v1633, %v1798
        %v1826 = vsub.f32 %v1634, %v1798
        %v1827 = vsub.f32 %v1635, %v1798
        %v1828 = vsub.f32 %v1636, %v1798
        %v1829 = vsub.f32 %v1637, %v1798
        %v1830 = vsub.f32 %v1638, %v1798
        %v1831 = vsub.f32 %v1639, %v1802
        %v1832 = vsub.f32 %v1640, %v1802
        %v1833 = vsub.f32 %v1641, %v1802
        %v1834 = vsub.f32 %v1642, %v1802
        %v1835 = vsub.f32 %v1643, %v1802
        %v1836 = vsub.f32 %v1644, %v1802
        %v1837 = vsub.f32 %v1645, %v1802
        %v1838 = vsub.f32 %v1646, %v1802
        %v1839 = vsub.f32 %v1647, %v1802
        %v1840 = vsub.f32 %v1648, %v1802
        %v1841 = vsub.f32 %v1649, %v1802
        %v1842 = vsub.f32 %v1650, %v1802
        %v1843 = vsub.f32 %v1651, %v1802
        %v1844 = vsub.f32 %v1652, %v1802
        %v1845 = vsub.f32 %v1653, %v1802
        %v1846 = vsub.f32 %v1654, %v1802
        %v1847 = vsub.f32 %v1655, %v1806
        %v1848 = vsub.f32 %v1656, %v1806
        %v1849 = vsub.f32 %v1657, %v1806
        %v1850 = vsub.f32 %v1658, %v1806
        %v1851 = vsub.f32 %v1659, %v1806
        %v1852 = vsub.f32 %v1660, %v1806
        %v1853 = vsub.f32 %v1661, %v1806
        %v1854 = vsub.f32 %v1662, %v1806
        %v1855 = vsub.f32 %v1663, %v1806
        %v1856 = vsub.f32 %v1664, %v1806
        %v1857 = vsub.f32 %v1665, %v1806
        %v1858 = vsub.f32 %v1666, %v1806
        %v1859 = vsub.f32 %v1667, %v1806
        %v1860 = vsub.f32 %v1668, %v1806
        %v1861 = vsub.f32 %v1669, %v1806
        %v1862 = vsub.f32 %v1670, %v1806
        %v1863 = vsub.f32 %v1671, %v1810
        %v1864 = vsub.f32 %v1672, %v1810
        %v1865 = vsub.f32 %v1673, %v1810
        %v1866 = vsub.f32 %v1674, %v1810
        %v1867 = vsub.f32 %v1675, %v1810
        %v1868 = vsub.f32 %v1676, %v1810
        %v1869 = vsub.f32 %v1677, %v1810
        %v1870 = vsub.f32 %v1678, %v1810
        %v1871 = vsub.f32 %v1679, %v1810
        %v1872 = vsub.f32 %v1680, %v1810
        %v1873 = vsub.f32 %v1681, %v1810
        %v1874 = vsub.f32 %v1682, %v1810
        %v1875 = vsub.f32 %v1683, %v1810
        %v1876 = vsub.f32 %v1684, %v1810
        %v1877 = vsub.f32 %v1685, %v1810
        %v1878 = vsub.f32 %v1686, %v1810
        %v1879 = vpack.c.bf16 %v1816, %v1815
        %v1880 = vpack.c.bf16 %v1818, %v1817
        %v1881 = vpack.c.bf16 %v1820, %v1819
        %v1882 = vpack.c.bf16 %v1822, %v1821
        %v1883 = vpack.c.bf16 %v1824, %v1823
        %v1884 = vpack.c.bf16 %v1826, %v1825
        %v1885 = vpack.c.bf16 %v1828, %v1827
        %v1886 = vpack.c.bf16 %v1830, %v1829
        %v1887 = vpack.c.bf16 %v1832, %v1831
        %v1888 = vpack.c.bf16 %v1834, %v1833
        %v1889 = vpack.c.bf16 %v1836, %v1835
        %v1890 = vpack.c.bf16 %v1838, %v1837
        %v1891 = vpack.c.bf16 %v1840, %v1839
        %v1892 = vpack.c.bf16 %v1842, %v1841
        %v1893 = vpack.c.bf16 %v1844, %v1843
        %v1894 = vpack.c.bf16 %v1846, %v1845
        %v1895 = vpack.c.bf16 %v1848, %v1847
        %v1896 = vpack.c.bf16 %v1850, %v1849
        %v1897 = vpack.c.bf16 %v1852, %v1851
        %v1898 = vpack.c.bf16 %v1854, %v1853
        %v1899 = vpack.c.bf16 %v1856, %v1855
        %v1900 = vpack.c.bf16 %v1858, %v1857
        %v1901 = vpack.c.bf16 %v1860, %v1859
        %v1902 = vpack.c.bf16 %v1862, %v1861
        %v1903 = vpack.c.bf16 %v1864, %v1863
        %v1904 = vpack.c.bf16 %v1866, %v1865
        %v1905 = vpack.c.bf16 %v1868, %v1867
        %v1906 = vpack.c.bf16 %v1870, %v1869
        %v1907 = vpack.c.bf16 %v1872, %v1871
        %v1908 = vpack.c.bf16 %v1874, %v1873
        %v1909 = vpack.c.bf16 %v1876, %v1875
        %v1910 = vpack.c.bf16 %v1878, %v1877
        %v1912 = vmul.bf16 %v1879, 1069105081
        %v1913 = vpow.bf16.pop %v1912
        %v1915 = vmul.bf16 %v1880, 1069105081
        %v1916 = vpow.bf16.pop %v1915
        %v1918 = vmul.bf16 %v1881, 1069105081
        %v1919 = vpow.bf16.pop %v1918
        %v1921 = vmul.bf16 %v1882, 1069105081
        %v1922 = vpow.bf16.pop %v1921
        %v1924 = vmul.bf16 %v1883, 1069105081
        %v1925 = vpow.bf16.pop %v1924
        %v1927 = vmul.bf16 %v1884, 1069105081
        %v1928 = vpow.bf16.pop %v1927
        %v1930 = vmul.bf16 %v1885, 1069105081
        %v1931 = vpow.bf16.pop %v1930
        %v1933 = vmul.bf16 %v1886, 1069105081
        %v1934 = vpow.bf16.pop %v1933
        %v1936 = vmul.bf16 %v1887, 1069105081
        %v1937 = vpow.bf16.pop %v1936
        %v1939 = vmul.bf16 %v1888, 1069105081
        %v1940 = vpow.bf16.pop %v1939
        %v1942 = vmul.bf16 %v1889, 1069105081
        %v1943 = vpow.bf16.pop %v1942
        %v1945 = vmul.bf16 %v1890, 1069105081
        %v1946 = vpow.bf16.pop %v1945
        %v1948 = vmul.bf16 %v1891, 1069105081
        %v1949 = vpow.bf16.pop %v1948
        %v1951 = vmul.bf16 %v1892, 1069105081
        %v1952 = vpow.bf16.pop %v1951
        %v1954 = vmul.bf16 %v1893, 1069105081
        %v1955 = vpow.bf16.pop %v1954
        %v1957 = vmul.bf16 %v1894, 1069105081
        %v1958 = vpow.bf16.pop %v1957
        %v1960 = vmul.bf16 %v1895, 1069105081
        %v1961 = vpow.bf16.pop %v1960
        %v1963 = vmul.bf16 %v1896, 1069105081
        %v1964 = vpow.bf16.pop %v1963
        %v1966 = vmul.bf16 %v1897, 1069105081
        %v1967 = vpow.bf16.pop %v1966
        %v1969 = vmul.bf16 %v1898, 1069105081
        %v1970 = vpow.bf16.pop %v1969
        %v1972 = vmul.bf16 %v1899, 1069105081
        %v1973 = vpow.bf16.pop %v1972
        %v1975 = vmul.bf16 %v1900, 1069105081
        %v1976 = vpow.bf16.pop %v1975
        %v1978 = vmul.bf16 %v1901, 1069105081
        %v1979 = vpow.bf16.pop %v1978
        %v1981 = vmul.bf16 %v1902, 1069105081
        %v1982 = vpow.bf16.pop %v1981
        %v1984 = vmul.bf16 %v1903, 1069105081
        %v1985 = vpow.bf16.pop %v1984
        %v1987 = vmul.bf16 %v1904, 1069105081
        %v1988 = vpow.bf16.pop %v1987
        %v1990 = vmul.bf16 %v1905, 1069105081
        %v1991 = vpow.bf16.pop %v1990
        %v1993 = vmul.bf16 %v1906, 1069105081
        %v1994 = vpow.bf16.pop %v1993
        %v1996 = vmul.bf16 %v1907, 1069105081
        %v1997 = vpow.bf16.pop %v1996
        %v1999 = vmul.bf16 %v1908, 1069105081
        %v2000 = vpow.bf16.pop %v1999
        %v2002 = vmul.bf16 %v1909, 1069105081
        %v2003 = vpow.bf16.pop %v2002
        %v2005 = vmul.bf16 %v1910, 1069105081
        %v2006 = vpow.bf16.pop %v2005
        %v2007 = vld [vmem:[#allocation4] sm:$0x1]
        %v2008 = vld [vmem:[#allocation4 + $0x1] sm:$0x1]
        %v2009 = vld [vmem:[#allocation4 + $0x2] sm:$0x1]
        %v2010 = vld [vmem:[#allocation4 + $0x3] sm:$0x1]
        %v2011 = vmul.f32 %v1784, %v2007
        %v2012 = vmul.f32 %v1786, %v2008
        %v2013 = vmul.f32 %v1788, %v2009
        %v2014 = vmul.f32 %v1790, %v2010
        %v2015 = vunpack.c.l.bf16 %v1913
        %v2016 = vunpack.c.h.bf16 %v1913
        %v2017 = vunpack.c.l.bf16 %v1916
        %v2018 = vunpack.c.h.bf16 %v1916
        %v2019 = vunpack.c.l.bf16 %v1919
        %v2020 = vunpack.c.h.bf16 %v1919
        %v2021 = vunpack.c.l.bf16 %v1922
        %v2022 = vunpack.c.h.bf16 %v1922
        %v2023 = vunpack.c.l.bf16 %v1925
        %v2024 = vunpack.c.h.bf16 %v1925
        %v2025 = vunpack.c.l.bf16 %v1928
        %v2026 = vunpack.c.h.bf16 %v1928
        %v2027 = vunpack.c.l.bf16 %v1931
        %v2028 = vunpack.c.h.bf16 %v1931
        %v2029 = vunpack.c.l.bf16 %v1934
        %v2030 = vunpack.c.h.bf16 %v1934
        %v2031 = vunpack.c.l.bf16 %v1937
        %v2032 = vunpack.c.h.bf16 %v1937
        %v2033 = vunpack.c.l.bf16 %v1940
        %v2034 = vunpack.c.h.bf16 %v1940
        %v2035 = vunpack.c.l.bf16 %v1943
        %v2036 = vunpack.c.h.bf16 %v1943
        %v2037 = vunpack.c.l.bf16 %v1946
        %v2038 = vunpack.c.h.bf16 %v1946
        %v2039 = vunpack.c.l.bf16 %v1949
        %v2040 = vunpack.c.h.bf16 %v1949
        %v2041 = vunpack.c.l.bf16 %v1952
        %v2042 = vunpack.c.h.bf16 %v1952
        %v2043 = vunpack.c.l.bf16 %v1955
        %v2044 = vunpack.c.h.bf16 %v1955
        %v2045 = vunpack.c.l.bf16 %v1958
        %v2046 = vunpack.c.h.bf16 %v1958
        %v2047 = vunpack.c.l.bf16 %v1961
        %v2048 = vunpack.c.h.bf16 %v1961
        %v2049 = vunpack.c.l.bf16 %v1964
        %v2050 = vunpack.c.h.bf16 %v1964
        %v2051 = vunpack.c.l.bf16 %v1967
        %v2052 = vunpack.c.h.bf16 %v1967
        %v2053 = vunpack.c.l.bf16 %v1970
        %v2054 = vunpack.c.h.bf16 %v1970
        %v2055 = vunpack.c.l.bf16 %v1973
        %v2056 = vunpack.c.h.bf16 %v1973
        %v2057 = vunpack.c.l.bf16 %v1976
        %v2058 = vunpack.c.h.bf16 %v1976
        %v2059 = vunpack.c.l.bf16 %v1979
        %v2060 = vunpack.c.h.bf16 %v1979
        %v2061 = vunpack.c.l.bf16 %v1982
        %v2062 = vunpack.c.h.bf16 %v1982
        %v2063 = vunpack.c.l.bf16 %v1985
        %v2064 = vunpack.c.h.bf16 %v1985
        %v2065 = vunpack.c.l.bf16 %v1988
        %v2066 = vunpack.c.h.bf16 %v1988
        %v2067 = vunpack.c.l.bf16 %v1991
        %v2068 = vunpack.c.h.bf16 %v1991
        %v2069 = vunpack.c.l.bf16 %v1994
        %v2070 = vunpack.c.h.bf16 %v1994
        %v2071 = vunpack.c.l.bf16 %v1997
        %v2072 = vunpack.c.h.bf16 %v1997
        %v2073 = vunpack.c.l.bf16 %v2000
        %v2074 = vunpack.c.h.bf16 %v2000
        %v2075 = vunpack.c.l.bf16 %v2003
        %v2076 = vunpack.c.h.bf16 %v2003
        %v2077 = vunpack.c.l.bf16 %v2006
        %v2078 = vunpack.c.h.bf16 %v2006
        %v2079 = vadd.f32 %v2015, %v2016
        %v2080 = vadd.f32 %v2079, %v2017
        %v2081 = vadd.f32 %v2080, %v2018
        %v2082 = vadd.f32 %v2081, %v2019
        %v2083 = vadd.f32 %v2082, %v2020
        %v2084 = vadd.f32 %v2083, %v2021
        %v2085 = vadd.f32 %v2084, %v2022
        %v2086 = vadd.f32 %v2085, %v2023
        %v2087 = vadd.f32 %v2086, %v2024
        %v2088 = vadd.f32 %v2087, %v2025
        %v2089 = vadd.f32 %v2088, %v2026
        %v2090 = vadd.f32 %v2089, %v2027
        %v2091 = vadd.f32 %v2090, %v2028
        %v2092 = vadd.f32 %v2091, %v2029
        %v2093 = vadd.f32 %v2092, %v2030
        %v2094 = vrot.slane %v2093, 4
        %v2095 = vadd.f32 %v2093, %v2094
        %v2096 = vrot.slane %v2095, 2
        %v2097 = vadd.f32 %v2095, %v2096
        %v2098 = vrot.slane %v2097, 1
        %v2099 = vadd.f32 %v2097, %v2098
        %v2100 = vadd.f32 %v2031, %v2032
        %v2101 = vadd.f32 %v2100, %v2033
        %v2102 = vadd.f32 %v2101, %v2034
        %v2103 = vadd.f32 %v2102, %v2035
        %v2104 = vadd.f32 %v2103, %v2036
        %v2105 = vadd.f32 %v2104, %v2037
        %v2106 = vadd.f32 %v2105, %v2038
        %v2107 = vadd.f32 %v2106, %v2039
        %v2108 = vadd.f32 %v2107, %v2040
        %v2109 = vadd.f32 %v2108, %v2041
        %v2110 = vadd.f32 %v2109, %v2042
        %v2111 = vadd.f32 %v2110, %v2043
        %v2112 = vadd.f32 %v2111, %v2044
        %v2113 = vadd.f32 %v2112, %v2045
        %v2114 = vadd.f32 %v2113, %v2046
        %v2115 = vrot.slane %v2114, 4
        %v2116 = vadd.f32 %v2114, %v2115
        %v2117 = vrot.slane %v2116, 2
        %v2118 = vadd.f32 %v2116, %v2117
        %v2119 = vrot.slane %v2118, 1
        %v2120 = vadd.f32 %v2118, %v2119
        %v2121 = vadd.f32 %v2047, %v2048
        %v2122 = vadd.f32 %v2121, %v2049
        %v2123 = vadd.f32 %v2122, %v2050
        %v2124 = vadd.f32 %v2123, %v2051
        %v2125 = vadd.f32 %v2124, %v2052
        %v2126 = vadd.f32 %v2125, %v2053
        %v2127 = vadd.f32 %v2126, %v2054
        %v2128 = vadd.f32 %v2127, %v2055
        %v2129 = vadd.f32 %v2128, %v2056
        %v2130 = vadd.f32 %v2129, %v2057
        %v2131 = vadd.f32 %v2130, %v2058
        %v2132 = vadd.f32 %v2131, %v2059
        %v2133 = vadd.f32 %v2132, %v2060
        %v2134 = vadd.f32 %v2133, %v2061
        %v2135 = vadd.f32 %v2134, %v2062
        %v2136 = vrot.slane %v2135, 4
        %v2137 = vadd.f32 %v2135, %v2136
        %v2138 = vrot.slane %v2137, 2
        %v2139 = vadd.f32 %v2137, %v2138
        %v2140 = vrot.slane %v2139, 1
        %v2141 = vadd.f32 %v2139, %v2140
        %v2142 = vadd.f32 %v2063, %v2064
        %v2143 = vadd.f32 %v2142, %v2065
        %v2144 = vadd.f32 %v2143, %v2066
        %v2145 = vadd.f32 %v2144, %v2067
        %v2146 = vadd.f32 %v2145, %v2068
        %v2147 = vadd.f32 %v2146, %v2069
        %v2148 = vadd.f32 %v2147, %v2070
        %v2149 = vadd.f32 %v2148, %v2071
        %v2150 = vadd.f32 %v2149, %v2072
        %v2151 = vadd.f32 %v2150, %v2073
        %v2152 = vadd.f32 %v2151, %v2074
        %v2153 = vadd.f32 %v2152, %v2075
        %v2154 = vadd.f32 %v2153, %v2076
        %v2155 = vadd.f32 %v2154, %v2077
        %v2156 = vadd.f32 %v2155, %v2078
        %v2157 = vrot.slane %v2156, 4
        %v2158 = vadd.f32 %v2156, %v2157
        %v2159 = vrot.slane %v2158, 2
        %v2160 = vadd.f32 %v2158, %v2159
        %v2161 = vrot.slane %v2160, 1
        %v2162 = vadd.f32 %v2160, %v2161
        %v2163 = vadd.f32 %v2011, %v2099
        %v2164 = vadd.f32 %v2012, %v2120
        %v2165 = vadd.f32 %v2013, %v2141
        %v2166 = vadd.f32 %v2014, %v2162
        %2167 = vst [vmem:[#allocation4] sm:$0x1] %v2163
        %2168 = vst [vmem:[#allocation4 + $0x1] sm:$0x1] %v2164
        %2169 = vst [vmem:[#allocation4 + $0x2] sm:$0x1] %v2165
        %2170 = vst [vmem:[#allocation4 + $0x3] sm:$0x1] %v2166
        %2171 = vmatprep.subr.bf16.mxu0 0
        %2172 = vmatpush1.bf16.msra.mxu0 %v1934
        %2173 = vmatprep.subr.bf16.mxu0 0
        %2174 = vmatpush1.bf16.msra.mxu0 %v1931
        %2175 = vmatprep.subr.bf16.mxu0 0
        %2176 = vmatpush1.bf16.msra.mxu0 %v1928
        %2177 = vmatprep.subr.bf16.mxu0 0
        %2178 = vmatpush1.bf16.msra.mxu0 %v1925
        %2179 = vmatprep.subr.bf16.mxu0 0
        %2180 = vmatpush1.bf16.msra.mxu0 %v1922
        %2181 = vmatprep.subr.bf16.mxu0 0
        %2182 = vmatpush1.bf16.msra.mxu0 %v1919
        %2183 = vmatprep.subr.bf16.mxu0 0
        %2184 = vmatpush1.bf16.msra.mxu0 %v1916
        %2185 = vmatprep.subr.bf16.mxu0 0
        %2186 = vmatpush1.bf16.msra.mxu0 %v1913
        %2187 = vmatprep.subr.bf16.mxu0 0
        %2188 = vmatpush2.bf16.msra.mxu0 0
        %2189 = vmatprep.subr.bf16.mxu0 0
        %2190 = vmatpush2.bf16.msra.mxu0 0
        %2191 = vmatprep.subr.bf16.mxu0 0
        %2192 = vmatpush2.bf16.msra.mxu0 0
        %2193 = vmatprep.subr.bf16.mxu0 0
        %2194 = vmatpush2.bf16.msra.mxu0 0
        %2195 = vmatprep.subr.bf16.mxu0 0
        %2196 = vmatpush2.bf16.msra.mxu0 0
        %2197 = vmatprep.subr.bf16.mxu0 0
        %2198 = vmatpush2.bf16.msra.mxu0 0
        %2199 = vmatprep.subr.bf16.mxu0 0
        %2200 = vmatpush2.bf16.msra.mxu0 0
        %2201 = vmatprep.subr.bf16.mxu0 0
        %2202 = vmatpush2.bf16.msra.mxu0 0
        %2203 = vmatprep.mubr.bf16.mxu0 0
        %2204 = vmatmul.mubr.bf16.gmra.mxu0 %v934
        %v2205 = vpop.f32.mrf.mxu0
        %v2206 = vadd.f32 0.0, %v2205
        %v2207 = vpop.f32.mrf.mxu0
        %v2208 = vpop.f32.mrf.mxu0
        %v2209 = vadd.f32 0.0, %v2208
        %v2210 = vpop.f32.mrf.mxu0
        %2211 = vmatprep.mubr.bf16.mxu0 0
        %2212 = vmatmul.mubr.bf16.gmra.mxu0 %v935
        %v2213 = vpop.f32.mrf.mxu0
        %v2214 = vadd.f32 0.0, %v2213
        %v2215 = vpop.f32.mrf.mxu0
        %v2216 = vpop.f32.mrf.mxu0
        %v2217 = vadd.f32 0.0, %v2216
        %v2218 = vpop.f32.mrf.mxu0
        %2219 = vdwg.mxu0
        %2220 = vmatprep.subr.bf16.mxu0 0
        %2221 = vmatpush1.bf16.msra.mxu0 %v1958
        %2222 = vmatprep.subr.bf16.mxu0 0
        %2223 = vmatpush1.bf16.msra.mxu0 %v1955
        %2224 = vmatprep.subr.bf16.mxu0 0
        %2225 = vmatpush1.bf16.msra.mxu0 %v1952
        %2226 = vmatprep.subr.bf16.mxu0 0
        %2227 = vmatpush1.bf16.msra.mxu0 %v1949
        %2228 = vmatprep.subr.bf16.mxu0 0
        %2229 = vmatpush1.bf16.msra.mxu0 %v1946
        %2230 = vmatprep.subr.bf16.mxu0 0
        %2231 = vmatpush1.bf16.msra.mxu0 %v1943
        %2232 = vmatprep.subr.bf16.mxu0 0
        %2233 = vmatpush1.bf16.msra.mxu0 %v1940
        %2234 = vmatprep.subr.bf16.mxu0 0
        %2235 = vmatpush1.bf16.msra.mxu0 %v1937
        %2236 = vmatprep.subr.bf16.mxu0 0
        %2237 = vmatpush2.bf16.msra.mxu0 0
        %2238 = vmatprep.subr.bf16.mxu0 0
        %2239 = vmatpush2.bf16.msra.mxu0 0
        %2240 = vmatprep.subr.bf16.mxu0 0
        %2241 = vmatpush2.bf16.msra.mxu0 0
        %2242 = vmatprep.subr.bf16.mxu0 0
        %2243 = vmatpush2.bf16.msra.mxu0 0
        %2244 = vmatprep.subr.bf16.mxu0 0
        %2245 = vmatpush2.bf16.msra.mxu0 0
        %2246 = vmatprep.subr.bf16.mxu0 0
        %2247 = vmatpush2.bf16.msra.mxu0 0
        %2248 = vmatprep.subr.bf16.mxu0 0
        %2249 = vmatpush2.bf16.msra.mxu0 0
        %2250 = vmatprep.subr.bf16.mxu0 0
        %2251 = vmatpush2.bf16.msra.mxu0 0
        %2252 = vmatprep.mubr.bf16.mxu0 0
        %2253 = vmatmul.mubr.bf16.gmra.mxu0 %v936
        %v2254 = vpop.f32.mrf.mxu0
        %v2255 = vadd.f32 0.0, %v2254
        %v2256 = vpop.f32.mrf.mxu0
        %v2257 = vpop.f32.mrf.mxu0
        %v2258 = vadd.f32 0.0, %v2257
        %v2259 = vpop.f32.mrf.mxu0
        %2260 = vmatprep.mubr.bf16.mxu0 0
        %2261 = vmatmul.mubr.bf16.gmra.mxu0 %v937
        %v2262 = vpop.f32.mrf.mxu0
        %v2263 = vadd.f32 0.0, %v2262
        %v2264 = vpop.f32.mrf.mxu0
        %v2265 = vpop.f32.mrf.mxu0
        %v2266 = vadd.f32 0.0, %v2265
        %v2267 = vpop.f32.mrf.mxu0
        %2268 = vdwg.mxu0
        %2269 = vmatprep.subr.bf16.mxu0 0
        %2270 = vmatpush1.bf16.msra.mxu0 %v1982
        %2271 = vmatprep.subr.bf16.mxu0 0
        %2272 = vmatpush1.bf16.msra.mxu0 %v1979
        %2273 = vmatprep.subr.bf16.mxu0 0
        %2274 = vmatpush1.bf16.msra.mxu0 %v1976
        %2275 = vmatprep.subr.bf16.mxu0 0
        %2276 = vmatpush1.bf16.msra.mxu0 %v1973
        %2277 = vmatprep.subr.bf16.mxu0 0
        %2278 = vmatpush1.bf16.msra.mxu0 %v1970
        %2279 = vmatprep.subr.bf16.mxu0 0
        %2280 = vmatpush1.bf16.msra.mxu0 %v1967
        %2281 = vmatprep.subr.bf16.mxu0 0
        %2282 = vmatpush1.bf16.msra.mxu0 %v1964
        %2283 = vmatprep.subr.bf16.mxu0 0
        %2284 = vmatpush1.bf16.msra.mxu0 %v1961
        %2285 = vmatprep.subr.bf16.mxu0 0
        %2286 = vmatpush2.bf16.msra.mxu0 0
        %2287 = vmatprep.subr.bf16.mxu0 0
        %2288 = vmatpush2.bf16.msra.mxu0 0
        %2289 = vmatprep.subr.bf16.mxu0 0
        %2290 = vmatpush2.bf16.msra.mxu0 0
        %2291 = vmatprep.subr.bf16.mxu0 0
        %2292 = vmatpush2.bf16.msra.mxu0 0
        %2293 = vmatprep.subr.bf16.mxu0 0
        %2294 = vmatpush2.bf16.msra.mxu0 0
        %2295 = vmatprep.subr.bf16.mxu0 0
        %2296 = vmatpush2.bf16.msra.mxu0 0
        %2297 = vmatprep.subr.bf16.mxu0 0
        %2298 = vmatpush2.bf16.msra.mxu0 0
        %2299 = vmatprep.subr.bf16.mxu0 0
        %2300 = vmatpush2.bf16.msra.mxu0 0
        %2301 = vmatprep.mubr.bf16.mxu0 0
        %2302 = vmatmul.mubr.bf16.gmra.mxu0 %v938
        %v2303 = vpop.f32.mrf.mxu0
        %v2304 = vadd.f32 0.0, %v2303
        %v2305 = vpop.f32.mrf.mxu0
        %v2306 = vpop.f32.mrf.mxu0
        %v2307 = vadd.f32 0.0, %v2306
        %v2308 = vpop.f32.mrf.mxu0
        %2309 = vmatprep.mubr.bf16.mxu0 0
        %2310 = vmatmul.mubr.bf16.gmra.mxu0 %v939
        %v2311 = vpop.f32.mrf.mxu0
        %v2312 = vadd.f32 0.0, %v2311
        %v2313 = vpop.f32.mrf.mxu0
        %v2314 = vpop.f32.mrf.mxu0
        %v2315 = vadd.f32 0.0, %v2314
        %v2316 = vpop.f32.mrf.mxu0
        %2317 = vdwg.mxu0
        %2318 = vmatprep.subr.bf16.mxu0 0
        %2319 = vmatpush1.bf16.msra.mxu0 %v2006
        %2320 = vmatprep.subr.bf16.mxu0 0
        %2321 = vmatpush1.bf16.msra.mxu0 %v2003
        %2322 = vmatprep.subr.bf16.mxu0 0
        %2323 = vmatpush1.bf16.msra.mxu0 %v2000
        %2324 = vmatprep.subr.bf16.mxu0 0
        %2325 = vmatpush1.bf16.msra.mxu0 %v1997
        %2326 = vmatprep.subr.bf16.mxu0 0
        %2327 = vmatpush1.bf16.msra.mxu0 %v1994
        %2328 = vmatprep.subr.bf16.mxu0 0
        %2329 = vmatpush1.bf16.msra.mxu0 %v1991
        %2330 = vmatprep.subr.bf16.mxu0 0
        %2331 = vmatpush1.bf16.msra.mxu0 %v1988
        %2332 = vmatprep.subr.bf16.mxu0 0
        %2333 = vmatpush1.bf16.msra.mxu0 %v1985
        %2334 = vmatprep.subr.bf16.mxu0 0
        %2335 = vmatpush2.bf16.msra.mxu0 0
        %2336 = vmatprep.subr.bf16.mxu0 0
        %2337 = vmatpush2.bf16.msra.mxu0 0
        %2338 = vmatprep.subr.bf16.mxu0 0
        %2339 = vmatpush2.bf16.msra.mxu0 0
        %2340 = vmatprep.subr.bf16.mxu0 0
        %2341 = vmatpush2.bf16.msra.mxu0 0
        %2342 = vmatprep.subr.bf16.mxu0 0
        %2343 = vmatpush2.bf16.msra.mxu0 0
        %2344 = vmatprep.subr.bf16.mxu0 0
        %2345 = vmatpush2.bf16.msra.mxu0 0
        %2346 = vmatprep.subr.bf16.mxu0 0
        %2347 = vmatpush2.bf16.msra.mxu0 0
        %2348 = vmatprep.subr.bf16.mxu0 0
        %2349 = vmatpush2.bf16.msra.mxu0 0
        %2350 = vmatprep.mubr.bf16.mxu0 0
        %2351 = vmatmul.mubr.bf16.gmra.mxu0 %v940
        %v2352 = vpop.f32.mrf.mxu0
        %v2353 = vadd.f32 0.0, %v2352
        %v2354 = vpop.f32.mrf.mxu0
        %v2355 = vpop.f32.mrf.mxu0
        %v2356 = vadd.f32 0.0, %v2355
        %v2357 = vpop.f32.mrf.mxu0
        %2358 = vmatprep.mubr.bf16.mxu0 0
        %2359 = vmatmul.mubr.bf16.gmra.mxu0 %v941
        %v2360 = vpop.f32.mrf.mxu0
        %v2361 = vadd.f32 0.0, %v2360
        %v2362 = vpop.f32.mrf.mxu0
        %v2363 = vpop.f32.mrf.mxu0
        %v2364 = vadd.f32 0.0, %v2363
        %v2365 = vpop.f32.mrf.mxu0
        %2366 = vdwg.mxu0
        %v2367 = vld [vmem:[#allocation5] sm:$0xff]
        %v2368 = vld [vmem:[#allocation5 + $0x8] sm:$0xff]
        %v2369 = vld [vmem:[#allocation5 + $0x10] sm:$0xff]
        %v2370 = vld [vmem:[#allocation5 + $0x18] sm:$0xff]
        %v2371 = vld [vmem:[#allocation5 + $0x20] sm:$0xff]
        %v2372 = vld [vmem:[#allocation5 + $0x28] sm:$0xff]
        %v2373 = vld [vmem:[#allocation5 + $0x30] sm:$0xff]
        %v2374 = vld [vmem:[#allocation5 + $0x38] sm:$0xff]
        %v2375 = vld [vmem:[#allocation5 + $0x40] sm:$0xff]
        %v2376 = vld [vmem:[#allocation5 + $0x48] sm:$0xff]
        %v2377 = vld [vmem:[#allocation5 + $0x50] sm:$0xff]
        %v2378 = vld [vmem:[#allocation5 + $0x58] sm:$0xff]
        %v2379 = vld [vmem:[#allocation5 + $0x60] sm:$0xff]
        %v2380 = vld [vmem:[#allocation5 + $0x68] sm:$0xff]
        %v2381 = vld [vmem:[#allocation5 + $0x70] sm:$0xff]
        %v2382 = vld [vmem:[#allocation5 + $0x78] sm:$0xff]
        %v2387 = vlaneseq
        %v2388 = vshrl.u32 %v2387, 7
        %v2389 = vsub.s32 0, %v2388
        %v2390 = vrot.slane %v1784, %v2389
        %v2391 = vlaneseq
        %v2392 = vshrl.u32 %v2391, 7
        %v2393 = vsub.s32 0, %v2392
        %v2394 = vrot.slane %v1786, %v2393
        %v2395 = vlaneseq
        %v2396 = vshrl.u32 %v2395, 7
        %v2397 = vsub.s32 0, %v2396
        %v2398 = vrot.slane %v1788, %v2397
        %v2399 = vlaneseq
        %v2400 = vshrl.u32 %v2399, 7
        %v2401 = vsub.s32 0, %v2400
        %v2402 = vrot.slane %v1790, %v2401
        %v2407 = vmul.f32 %v2390, %v2367
        %v2408 = vmul.f32 %v2390, %v2368
        %v2409 = vmul.f32 %v2390, %v2369
        %v2410 = vmul.f32 %v2390, %v2370
        %v2411 = vmul.f32 %v2394, %v2371
        %v2412 = vmul.f32 %v2394, %v2372
        %v2413 = vmul.f32 %v2394, %v2373
        %v2414 = vmul.f32 %v2394, %v2374
        %v2415 = vmul.f32 %v2398, %v2375
        %v2416 = vmul.f32 %v2398, %v2376
        %v2417 = vmul.f32 %v2398, %v2377
        %v2418 = vmul.f32 %v2398, %v2378
        %v2419 = vmul.f32 %v2402, %v2379
        %v2420 = vmul.f32 %v2402, %v2380
        %v2421 = vmul.f32 %v2402, %v2381
        %v2422 = vmul.f32 %v2402, %v2382
        %v2423 = vadd.f32 %v2407, %v2206
        %v2424 = vadd.f32 %v2408, %v2209
        %v2425 = vadd.f32 %v2409, %v2214
        %v2426 = vadd.f32 %v2410, %v2217
        %v2427 = vadd.f32 %v2411, %v2255
        %v2428 = vadd.f32 %v2412, %v2258
        %v2429 = vadd.f32 %v2413, %v2263
        %v2430 = vadd.f32 %v2414, %v2266
        %v2431 = vadd.f32 %v2415, %v2304
        %v2432 = vadd.f32 %v2416, %v2307
        %v2433 = vadd.f32 %v2417, %v2312
        %v2434 = vadd.f32 %v2418, %v2315
        %v2435 = vadd.f32 %v2419, %v2353
        %v2436 = vadd.f32 %v2420, %v2356
        %v2437 = vadd.f32 %v2421, %v2361
        %v2438 = vadd.f32 %v2422, %v2364
        %2439 = vst [vmem:[#allocation5] sm:$0xff] %v2423
        %2440 = vst [vmem:[#allocation5 + $0x8] sm:$0xff] %v2424
        %2441 = vst [vmem:[#allocation5 + $0x10] sm:$0xff] %v2425
        %2442 = vst [vmem:[#allocation5 + $0x18] sm:$0xff] %v2426
        %2443 = vst [vmem:[#allocation5 + $0x20] sm:$0xff] %v2427
        %2444 = vst [vmem:[#allocation5 + $0x28] sm:$0xff] %v2428
        %2445 = vst [vmem:[#allocation5 + $0x30] sm:$0xff] %v2429
        %2446 = vst [vmem:[#allocation5 + $0x38] sm:$0xff] %v2430
        %2447 = vst [vmem:[#allocation5 + $0x40] sm:$0xff] %v2431
        %2448 = vst [vmem:[#allocation5 + $0x48] sm:$0xff] %v2432
        %2449 = vst [vmem:[#allocation5 + $0x50] sm:$0xff] %v2433
        %2450 = vst [vmem:[#allocation5 + $0x58] sm:$0xff] %v2434
        %2451 = vst [vmem:[#allocation5 + $0x60] sm:$0xff] %v2435
        %2452 = vst [vmem:[#allocation5 + $0x68] sm:$0xff] %v2436
        %2453 = vst [vmem:[#allocation5 + $0x70] sm:$0xff] %v2437
        %2454 = vst [vmem:[#allocation5 + $0x78] sm:$0xff] %v2438
        %2455 = vst [vmem:[#allocation3] sm:$0x1] %v1775
        %2456 = vst [vmem:[#allocation3 + $0x1] sm:$0x1] %v1776
        %2457 = vst [vmem:[#allocation3 + $0x2] sm:$0x1] %v1777
        %2458 = vst [vmem:[#allocation3 + $0x3] sm:$0x1] %v1778
        // Predicated region
        $region49: #{tpu_custom_call.1} parent=43 // pred_check
          %p2459 = pneg %p308
        $region50: #{tpu_custom_call.1} parent=43 // pred_check_branch
          %2461 = sbr.rel (%p2459) target = $region52
        $region51: #{tpu_custom_call.1} parent=43 // pred_region
          %v2462 = vld [vmem:[#allocation4] sm:$0x1]
          %v2463 = vld [vmem:[#allocation4 + $0x1] sm:$0x1]
          %v2464 = vld [vmem:[#allocation4 + $0x2] sm:$0x1]
          %v2465 = vld [vmem:[#allocation4 + $0x3] sm:$0x1]
          %v2466 = vrcp.pop %v2462
          %v2467 = vrcp.pop %v2463
          %v2468 = vrcp.pop %v2464
          %v2469 = vrcp.pop %v2465
          %v2470 = vld [vmem:[#allocation5] sm:$0xff]
          %v2471 = vld [vmem:[#allocation5 + $0x8] sm:$0xff]
          %v2472 = vld [vmem:[#allocation5 + $0x10] sm:$0xff]
          %v2473 = vld [vmem:[#allocation5 + $0x18] sm:$0xff]
          %v2474 = vld [vmem:[#allocation5 + $0x20] sm:$0xff]
          %v2475 = vld [vmem:[#allocation5 + $0x28] sm:$0xff]
          %v2476 = vld [vmem:[#allocation5 + $0x30] sm:$0xff]
          %v2477 = vld [vmem:[#allocation5 + $0x38] sm:$0xff]
          %v2478 = vld [vmem:[#allocation5 + $0x40] sm:$0xff]
          %v2479 = vld [vmem:[#allocation5 + $0x48] sm:$0xff]
          %v2480 = vld [vmem:[#allocation5 + $0x50] sm:$0xff]
          %v2481 = vld [vmem:[#allocation5 + $0x58] sm:$0xff]
          %v2482 = vld [vmem:[#allocation5 + $0x60] sm:$0xff]
          %v2483 = vld [vmem:[#allocation5 + $0x68] sm:$0xff]
          %v2484 = vld [vmem:[#allocation5 + $0x70] sm:$0xff]
          %v2485 = vld [vmem:[#allocation5 + $0x78] sm:$0xff]
          %v2490 = vlaneseq
          %v2491 = vshrl.u32 %v2490, 7
          %v2492 = vsub.s32 0, %v2491
          %v2493 = vrot.slane %v2466, %v2492
          %v2494 = vlaneseq
          %v2495 = vshrl.u32 %v2494, 7
          %v2496 = vsub.s32 0, %v2495
          %v2497 = vrot.slane %v2467, %v2496
          %v2498 = vlaneseq
          %v2499 = vshrl.u32 %v2498, 7
          %v2500 = vsub.s32 0, %v2499
          %v2501 = vrot.slane %v2468, %v2500
          %v2502 = vlaneseq
          %v2503 = vshrl.u32 %v2502, 7
          %v2504 = vsub.s32 0, %v2503
          %v2505 = vrot.slane %v2469, %v2504
          %v2510 = vmul.f32 %v2470, %v2493
          %v2511 = vmul.f32 %v2471, %v2493
          %v2512 = vmul.f32 %v2472, %v2493
          %v2513 = vmul.f32 %v2473, %v2493
          %v2514 = vmul.f32 %v2474, %v2497
          %v2515 = vmul.f32 %v2475, %v2497
          %v2516 = vmul.f32 %v2476, %v2497
          %v2517 = vmul.f32 %v2477, %v2497
          %v2518 = vmul.f32 %v2478, %v2501
          %v2519 = vmul.f32 %v2479, %v2501
          %v2520 = vmul.f32 %v2480, %v2501
          %v2521 = vmul.f32 %v2481, %v2501
          %v2522 = vmul.f32 %v2482, %v2505
          %v2523 = vmul.f32 %v2483, %v2505
          %v2524 = vmul.f32 %v2484, %v2505
          %v2525 = vmul.f32 %v2485, %v2505
          %v2526 = vpack.c.bf16 %v2511, %v2510
          %v2527 = vpack.c.bf16 %v2513, %v2512
          %v2528 = vpack.c.bf16 %v2515, %v2514
          %v2529 = vpack.c.bf16 %v2517, %v2516
          %v2530 = vpack.c.bf16 %v2519, %v2518
          %v2531 = vpack.c.bf16 %v2521, %v2520
          %v2532 = vpack.c.bf16 %v2523, %v2522
          %v2533 = vpack.c.bf16 %v2525, %v2524
          %v2534 = vld [vmem:[%s4] sm:$0xf]
          %v2535 = vld [vmem:[%s5] sm:$0xff]
          %2537 = vset.pattern.permute.xlu0 0
          %2538 = vperm.xlu0 %2537, %v2535
          %v2539 = vpop.permute.xlu0 %2538
          %2541 = vmatprep.subr.bf16.mxu0 0
          %2542 = vmatpush1.bf16.msra.mxu0 %v2533
          %2543 = vmatprep.subr.bf16.mxu0 0
          %2544 = vmatpush1.bf16.msra.mxu0 %v2532
          %2545 = vmatprep.subr.bf16.mxu0 0
          %2546 = vmatpush1.bf16.msra.mxu0 %v2531
          %2547 = vmatprep.subr.bf16.mxu0 0
          %2548 = vmatpush1.bf16.msra.mxu0 %v2530
          %2549 = vmatprep.subr.bf16.mxu0 0
          %2550 = vmatpush1.bf16.msra.mxu0 %v2529
          %2551 = vmatprep.subr.bf16.mxu0 0
          %2552 = vmatpush1.bf16.msra.mxu0 %v2528
          %2553 = vmatprep.subr.bf16.mxu0 0
          %2554 = vmatpush1.bf16.msra.mxu0 %v2527
          %2555 = vmatprep.subr.bf16.mxu0 0
          %2556 = vmatpush1.bf16.msra.mxu0 %v2526
          %2557 = vmatprep.subr.bf16.mxu0 0
          %2558 = vmatpush2.bf16.msra.mxu0 0
          %2559 = vmatprep.subr.bf16.mxu0 0
          %2560 = vmatpush2.bf16.msra.mxu0 0
          %2561 = vmatprep.subr.bf16.mxu0 0
          %2562 = vmatpush2.bf16.msra.mxu0 0
          %2563 = vmatprep.subr.bf16.mxu0 0
          %2564 = vmatpush2.bf16.msra.mxu0 0
          %2565 = vmatprep.subr.bf16.mxu0 0
          %2566 = vmatpush2.bf16.msra.mxu0 0
          %2567 = vmatprep.subr.bf16.mxu0 0
          %2568 = vmatpush2.bf16.msra.mxu0 0
          %2569 = vmatprep.subr.bf16.mxu0 0
          %2570 = vmatpush2.bf16.msra.mxu0 0
          %2571 = vmatprep.subr.bf16.mxu0 0
          %2572 = vmatpush2.bf16.msra.mxu0 0
          %2573 = vmatprep.mubr.bf16.mxu0 0
          %2574 = vmatmul.mubr.bf16.gmra.mxu0 %v2534
          %v2575 = vpop.f32.mrf.mxu0
          %v2576 = vadd.f32 %v2539, %v2575
          %v2577 = vpop.f32.mrf.mxu0
          %v2578 = vpop.f32.mrf.mxu0
          %v2579 = vpop.f32.mrf.mxu0
          %2580 = vdwg.mxu0
          %2581 = vst [vmem:[%s292] sm:$0xff] %v2576
        $region52: #{tpu_custom_call.1} parent=43 // pred_fallthru
          _
        %s2582 = sand.u32 %s189, 1
        %s2583 = scalar_lea.sflag [#allocation7], %s2582
        %s2584 = sand.u32 %s189, 1
        %s2585 = smul.addr %s2584, 8
        %s2586 = scalar_lea.vmem [#allocation6], %s2585
        // Predicated region
        $region53: #{tpu_custom_call.1} parent=43 // pred_check
          %p2587 = pneg %p199
        $region54: #{tpu_custom_call.1} parent=43 // pred_check_branch
          %2589 = sbr.rel (%p2587) target = $region56
        $region55: #{tpu_custom_call.1} parent=43 // pred_region
          %s2591 = ssub.s32 128, 128
          %2592 = vsyncadd %s2583, %s2591
          %s2593 = sadd.s32 %s26, %s25
          %s2594 = smul.addr %s2593, 128
          %s2595 = scalar_lea.hbm %s6, %s2594
          %s2597 = sshll.u32 %s2586, 4
          %s2598 = int_to_ptr.vmem [resolvable:$true] %s2597
          %2600 = dma.vmem_to_hbm [thread:$0]  %s2598, 128, %s2595, %s2583
        $region56: #{tpu_custom_call.1} parent=43 // pred_fallthru
          _
      $region44: #{tpu_custom_call.1} parent=5 // pred_fallthru
        _
      %p2601 = scmp.le.s32.totalorder 2, %s15
      // Predicated region
      $region57: #{tpu_custom_call.1} parent=5 // pred_check
        %p2602 = pneg %p2601
      $region58: #{tpu_custom_call.1} parent=5 // pred_check_branch
        %2604 = sbr.rel (%p2602) target = $region60
      $region59: #{tpu_custom_call.1} parent=5 // pred_region
        %s2605 = ssub.s32 %s15, 2
        // Predicated region
        $region61: #{tpu_custom_call.1} parent=59 // pred_check
          %p2606 = pneg %p205
        $region62: #{tpu_custom_call.1} parent=59 // pred_check_branch
          %2608 = sbr.rel (%p2606) target = $region64
        $region63: #{tpu_custom_call.1} parent=59 // pred_region
          %s2609 = sand.u32 %s190, 1
          %s2610 = scalar_lea.sflag [#allocation7], %s2609
          %s2611 = sand.u32 %s190, 1
          %s2612 = smul.addr %s2611, 8
          %s2613 = scalar_lea.vmem [#allocation6], %s2612
          %2614 = dma.done %s2610, 128
        $region64: #{tpu_custom_call.1} parent=59 // pred_fallthru
          _
      $region60: #{tpu_custom_call.1} parent=5 // pred_fallthru
        _
    $region6: #{tpu_custom_call.1} parent=1 // loop_footer
      %s19 = sadd.s32 1, %s15
    $region7: #{tpu_custom_call.1} parent=1 // loop_footer_branch
      %14 = sbr.rel target = $region3
    $region8: #{tpu_custom_call.1} parent=1 // loop_exit
      _
    %2615 = vsyncpa [#allocation7], 1
    %s2616 = scalar_lea.sflag [#allocation7], 1
    %2617 = vsyncpa %s2616, 1

</llo_original>
